<compile_context>
chip_gen: v5e
topology: v5e:2x2
jax: 0.10.0
libtpu: 0.0.40
codegen_flags: <defaults>
</compile_context>

<pallas_src>
import jax
import jax.numpy as jnp
from jax.experimental import pallas as pl
from jax.experimental.pallas import tpu as pltpu

OUT_LANES = 128  # lane-dense output slab width (group sums live in cols 0..2)


def deeponet_kernel(x_ref, u_ref,
                    tw1_ref, tb1_ref, tw2_ref, tb2_ref,
                    bw1_ref, bb1_ref, bw2_ref, bb2_ref,
                    g_ref, out_ref):
    f32 = jnp.float32

    # ---- trunk layer 1 ----
    d_x = x_ref.shape[1]
    if d_x <= 8:
        # VPU path: a K=2 matmul would pad the contraction to a full MXU tile
        # for ~1% utilization; two broadcast FMAs are free in idle VALU slots.
        x = x_ref[...].astype(f32)
        w1 = tw1_ref[...].astype(f32)
        th_pre = tb1_ref[...].astype(f32)
        for k in range(d_x):                         # unrolled at trace time
            th_pre = th_pre + x[:, k:k + 1] * w1[k:k + 1, :]
    else:
        th_pre = (jnp.dot(x_ref[...], tw1_ref[...],
                          preferred_element_type=f32)
                  + tb1_ref[...].astype(f32))
    th = jnp.tanh(th_pre)

    # ---- trunk layer 2 (MXU, f32 accumulate) ----
    t = (jnp.dot(th.astype(tw2_ref.dtype), tw2_ref[...],
                 preferred_element_type=f32)
         + tb2_ref[...].astype(f32))

    # ---- branch MLP (MXU, f32 accumulate) ----
    bh = jnp.tanh(
        jnp.dot(u_ref[...], bw1_ref[...], preferred_element_type=f32)
        + bb1_ref[...].astype(f32))
    b = (jnp.dot(bh.astype(bw2_ref.dtype), bw2_ref[...],
                 preferred_element_type=f32)
         + bb2_ref[...].astype(f32))

    # ---- DeepONet combine as a selector matmul -> lane-dense output ----
    # G[r, c] = 1 if c == r // p else 0, so column j of (t*b) @ G is the
    # per-row dot product of group j.  Replaces 3 XLU reductions + a 3-lane
    # masked store with one MXU op and an unmasked 128-lane store.
    out_ref[...] = jnp.dot(t * b, g_ref[...], preferred_element_type=f32)


def deeponet_forward(x, u, params, *, tm=256, use_bf16=True):
    """x: (N, d_x) trunk input; u: (N, d_u) branch input; returns (N, 3)."""
    N, d_x = x.shape
    d_u = u.shape[1]
    (tw1, tb1, tw2, tb2, bw1, bb1, bw2, bb2) = params
    hidden = tw1.shape[1]
    out_dim = tw2.shape[1]
    assert out_dim % 3 == 0
    p_basis = out_dim // 3

    # bf16 MXU inputs (f32 accumulation); everything elementwise stays f32.
    if use_bf16:
        u_c = u.astype(jnp.bfloat16)
        bw1_c = bw1.astype(jnp.bfloat16)
        tw2_c = tw2.astype(jnp.bfloat16)
        bw2_c = bw2.astype(jnp.bfloat16)
        if d_x > 8:  # trunk layer 1 only hits the MXU when d_x is not tiny
            x_c, tw1_c = x.astype(jnp.bfloat16), tw1.astype(jnp.bfloat16)
        else:
            x_c, tw1_c = x.astype(jnp.float32), tw1.astype(jnp.float32)
    else:
        x_c, u_c = x.astype(jnp.float32), u.astype(jnp.float32)
        tw1_c, tw2_c, bw1_c, bw2_c = tw1, tw2, bw1, bw2

    # Constant 0/1 group-selector matrix for the epilogue matmul.
    col = jax.lax.broadcasted_iota(jnp.int32, (out_dim, OUT_LANES), 1)
    row = jax.lax.broadcasted_iota(jnp.int32, (out_dim, OUT_LANES), 0)
    G = (col == row // p_basis).astype(jnp.float32)

    # Pad batch to a multiple of tm (ragged last tile handled by padding).
    n_tiles = pl.cdiv(N, tm)
    N_pad = n_tiles * tm
    if N_pad != N:
        pad = N_pad - N
        x_c = jnp.pad(x_c, ((0, pad), (0, 0)))
        u_c = jnp.pad(u_c, ((0, pad), (0, 0)))

    full = lambda a: pl.BlockSpec(a.shape, lambda i: (0, 0))
    grid_spec = pltpu.PrefetchScalarGridSpec(
        num_scalar_prefetch=0,
        grid=(n_tiles,),
        in_specs=[
            pl.BlockSpec((tm, d_x), lambda i: (i, 0)),   # x tile
            pl.BlockSpec((tm, d_u), lambda i: (i, 0)),   # u tile
            full(tw1_c), full(tb1), full(tw2_c), full(tb2),
            full(bw1_c), full(bb1), full(bw2_c), full(bb2),
            full(G),
        ],
        # Lane-dense 128-wide output slab -> unmasked stores, contiguous DMAs.
        # TODO(synk): for very large N emit a (3, N) transposed output instead
        # to avoid the 512 B/row HBM writeback of the padded slab.
        out_specs=pl.BlockSpec((tm, OUT_LANES), lambda i: (i, 0)),
    )

    flops = 2 * N_pad * (d_x * hidden + d_u * hidden
                         + 2 * hidden * out_dim
                         + out_dim * OUT_LANES) + N_pad * out_dim
    weight_bytes = sum(int(a.size) * a.dtype.itemsize
                       for a in (tw1_c, tb1, tw2_c, tb2,
                                 bw1_c, bb1, bw2_c, bb2, G))
    bytes_accessed = (int(x_c.size) * x_c.dtype.itemsize
                      + int(u_c.size) * u_c.dtype.itemsize
                      + weight_bytes + N_pad * OUT_LANES * 4)
    cost = pl.CostEstimate(flops=int(flops),
                           transcendentals=int(2 * N_pad * hidden),
                           bytes_accessed=int(bytes_accessed))

    out_pad = pl.pallas_call(
        deeponet_kernel,
        out_shape=jax.ShapeDtypeStruct((N_pad, OUT_LANES), jnp.float32),
        grid_spec=grid_spec,
        compiler_params=pltpu.CompilerParams(
            dimension_semantics=("parallel",)),
        cost_estimate=cost,
    )(x_c, u_c, tw1_c, tb1, tw2_c, tb2, bw1_c, bb1, bw2_c, bb2, G)

    return out_pad[:N, :3]


def reference_forward(x, u, params):
    (tw1, tb1, tw2, tb2, bw1, bb1, bw2, bb2) = params
    t = jnp.tanh(x @ tw1 + tb1) @ tw2 + tb2
    b = jnp.tanh(u @ bw1 + bb1) @ bw2 + bb2
    p = t.shape[1] // 3
    t3 = t.reshape(-1, 3, p)
    b3 = b.reshape(-1, 3, p)
    return jnp.sum(t3 * b3, axis=-1)  # (N, 3)


if __name__ == "__main__":
    key = jax.random.PRNGKey(0)

    # Small DeepONet-LDC-like shapes.
    N = 512          # number of (coordinate, parameter) query rows
    d_x = 2          # trunk input: (x, y) coordinates of LDC domain
    d_u = 16         # branch input: boundary/parameter samples
    hidden = 32      # MLP hidden width
    p = 32           # basis functions per output field (u, v, p)
    out_dim = 3 * p  # both nets output 3*p features

    keys = jax.random.split(key, 10)
    tw1 = jax.random.normal(keys[0], (d_x, hidden), jnp.float32) * 0.5
    tb1 = jax.random.normal(keys[1], (1, hidden), jnp.float32) * 0.1
    tw2 = jax.random.normal(keys[2], (hidden, out_dim), jnp.float32) * 0.2
    tb2 = jax.random.normal(keys[3], (1, out_dim), jnp.float32) * 0.1
    bw1 = jax.random.normal(keys[4], (d_u, hidden), jnp.float32) * 0.3
    bb1 = jax.random.normal(keys[5], (1, hidden), jnp.float32) * 0.1
    bw2 = jax.random.normal(keys[6], (hidden, out_dim), jnp.float32) * 0.2
    bb2 = jax.random.normal(keys[7], (1, out_dim), jnp.float32) * 0.1
    params = (tw1, tb1, tw2, tb2, bw1, bb1, bw2, bb2)

    x = jax.random.normal(keys[8], (N, d_x), jnp.float32)
    u = jax.random.normal(keys[9], (N, d_u), jnp.float32)

    ref = reference_forward(x, u, params)

    # f32 path (tight check against the f32 reference).
    out_f32 = jax.block_until_ready(
        deeponet_forward(x, u, params, tm=256, use_bf16=False))
    assert out_f32.shape == (N, 3)
    err_f32 = float(jnp.max(jnp.abs(out_f32 - ref)))
    assert jnp.allclose(out_f32, ref, atol=1e-3, rtol=1e-3), err_f32

    # bf16-MXU path (looser tolerance, as expected for bf16 inputs).
    out_bf16 = jax.block_until_ready(
        deeponet_forward(x, u, params, tm=256, use_bf16=True))
    err_bf16 = float(jnp.max(jnp.abs(out_bf16 - ref)))
    assert jnp.allclose(out_bf16, ref, atol=5e-2, rtol=5e-2), err_bf16

    # Ragged batch (N not a multiple of tm) exercises the padding path.
    N2 = 200
    x2 = x[:N2]
    u2 = u[:N2]
    out_rag = jax.block_until_ready(
        deeponet_forward(x2, u2, params, tm=256, use_bf16=False))
    assert out_rag.shape == (N2, 3)
    assert jnp.allclose(out_rag, ref[:N2], atol=1e-3, rtol=1e-3)

    print("KERNEL_OK")
</pallas_src>

<mosaic_0001>
module attributes {stable_mosaic.version = 11 : i64} {
  func.func @deeponet_kernel(%arg0: i32, %arg1: memref<256x2xf32, #tpu.memory_space<vmem>>, %arg2: memref<256x16xf32, #tpu.memory_space<vmem>>, %arg3: memref<2x32xf32, #tpu.memory_space<vmem>>, %arg4: memref<1x32xf32, #tpu.memory_space<vmem>>, %arg5: memref<32x96xf32, #tpu.memory_space<vmem>>, %arg6: memref<1x96xf32, #tpu.memory_space<vmem>>, %arg7: memref<16x32xf32, #tpu.memory_space<vmem>>, %arg8: memref<1x32xf32, #tpu.memory_space<vmem>>, %arg9: memref<32x96xf32, #tpu.memory_space<vmem>>, %arg10: memref<1x96xf32, #tpu.memory_space<vmem>>, %arg11: memref<96x128xf32, #tpu.memory_space<vmem>>, %arg12: memref<256x128xf32, #tpu.memory_space<vmem>>) attributes {dimension_semantics = [#tpu.dimension_semantics<parallel>], iteration_bounds = array<i64: 2>, scalar_prefetch = 0 : i64, scratch_operands = 0 : i64, tpu.core_type = #tpu.core_type<tc>, window_params = [{transform_indices = @transform_0, window_bounds = array<i64: 256, 2>}, {transform_indices = @transform_1, window_bounds = array<i64: 256, 16>}, {pipeline_mode = #tpu.pipeline_mode<synchronous>, transform_indices = @transform_2, window_bounds = array<i64: 2, 32>}, {pipeline_mode = #tpu.pipeline_mode<synchronous>, transform_indices = @transform_3, window_bounds = array<i64: 1, 32>}, {pipeline_mode = #tpu.pipeline_mode<synchronous>, transform_indices = @transform_4, window_bounds = array<i64: 32, 96>}, {pipeline_mode = #tpu.pipeline_mode<synchronous>, transform_indices = @transform_5, window_bounds = array<i64: 1, 96>}, {pipeline_mode = #tpu.pipeline_mode<synchronous>, transform_indices = @transform_6, window_bounds = array<i64: 16, 32>}, {pipeline_mode = #tpu.pipeline_mode<synchronous>, transform_indices = @transform_7, window_bounds = array<i64: 1, 32>}, {pipeline_mode = #tpu.pipeline_mode<synchronous>, transform_indices = @transform_8, window_bounds = array<i64: 32, 96>}, {pipeline_mode = #tpu.pipeline_mode<synchronous>, transform_indices = @transform_9, window_bounds = array<i64: 1, 96>}, {pipeline_mode = #tpu.pipeline_mode<synchronous>, transform_indices = @transform_10, window_bounds = array<i64: 96, 128>}, {transform_indices = @transform_11, window_bounds = array<i64: 256, 128>}]} {
    %c0 = arith.constant 0 : index
    %c0_0 = arith.constant 0 : index
    %0 = vector.load %arg1[%c0, %c0_0] : memref<256x2xf32, #tpu.memory_space<vmem>>, vector<256x2xf32>
    %c0_1 = arith.constant 0 : index
    %c0_2 = arith.constant 0 : index
    %1 = vector.load %arg3[%c0_1, %c0_2] : memref<2x32xf32, #tpu.memory_space<vmem>>, vector<2x32xf32>
    %c0_3 = arith.constant 0 : index
    %c0_4 = arith.constant 0 : index
    %2 = vector.load %arg4[%c0_3, %c0_4] : memref<1x32xf32, #tpu.memory_space<vmem>>, vector<1x32xf32>
    %3 = vector.extract_strided_slice %0 {offsets = [0, 0], sizes = [256, 1], strides = [1, 1]} : vector<256x2xf32> to vector<256x1xf32>
    %4 = vector.extract_strided_slice %1 {offsets = [0, 0], sizes = [1, 32], strides = [1, 1]} : vector<2x32xf32> to vector<1x32xf32>
    %5 = vector.broadcast %3 : vector<256x1xf32> to vector<256x32xf32>
    %6 = vector.broadcast %4 : vector<1x32xf32> to vector<256x32xf32>
    %7 = arith.mulf %5, %6 : vector<256x32xf32>
    %8 = vector.broadcast %2 : vector<1x32xf32> to vector<256x32xf32>
    %9 = arith.addf %8, %7 : vector<256x32xf32>
    %10 = vector.extract_strided_slice %0 {offsets = [0, 1], sizes = [256, 1], strides = [1, 1]} : vector<256x2xf32> to vector<256x1xf32>
    %11 = vector.extract_strided_slice %1 {offsets = [1, 0], sizes = [1, 32], strides = [1, 1]} : vector<2x32xf32> to vector<1x32xf32>
    %12 = vector.broadcast %10 : vector<256x1xf32> to vector<256x32xf32>
    %13 = vector.broadcast %11 : vector<1x32xf32> to vector<256x32xf32>
    %14 = arith.mulf %12, %13 : vector<256x32xf32>
    %15 = arith.addf %9, %14 : vector<256x32xf32>
    %16 = math.tanh %15 : vector<256x32xf32>
    %c0_5 = arith.constant 0 : index
    %c0_6 = arith.constant 0 : index
    %17 = vector.load %arg5[%c0_5, %c0_6] : memref<32x96xf32, #tpu.memory_space<vmem>>, vector<32x96xf32>
    %cst = arith.constant dense<0.000000e+00> : vector<256x96xf32>
    %18 = tpu.matmul %16, %17, %cst {dimension_numbers = #tpu.dot_dimension_numbers<[1], [0], [0], [1], [0, 0, 1, 1], [], []>} : vector<256x32xf32>, vector<32x96xf32>, vector<256x96xf32> -> vector<256x96xf32>
    %c0_7 = arith.constant 0 : index
    %c0_8 = arith.constant 0 : index
    %19 = vector.load %arg6[%c0_7, %c0_8] : memref<1x96xf32, #tpu.memory_space<vmem>>, vector<1x96xf32>
    %20 = vector.broadcast %19 : vector<1x96xf32> to vector<256x96xf32>
    %21 = arith.addf %18, %20 : vector<256x96xf32>
    %c0_9 = arith.constant 0 : index
    %c0_10 = arith.constant 0 : index
    %22 = vector.load %arg2[%c0_9, %c0_10] : memref<256x16xf32, #tpu.memory_space<vmem>>, vector<256x16xf32>
    %c0_11 = arith.constant 0 : index
    %c0_12 = arith.constant 0 : index
    %23 = vector.load %arg7[%c0_11, %c0_12] : memref<16x32xf32, #tpu.memory_space<vmem>>, vector<16x32xf32>
    %cst_13 = arith.constant dense<0.000000e+00> : vector<256x32xf32>
    %24 = tpu.matmul %22, %23, %cst_13 {dimension_numbers = #tpu.dot_dimension_numbers<[1], [0], [0], [1], [0, 0, 1, 1], [], []>} : vector<256x16xf32>, vector<16x32xf32>, vector<256x32xf32> -> vector<256x32xf32>
    %c0_14 = arith.constant 0 : index
    %c0_15 = arith.constant 0 : index
    %25 = vector.load %arg8[%c0_14, %c0_15] : memref<1x32xf32, #tpu.memory_space<vmem>>, vector<1x32xf32>
    %26 = vector.broadcast %25 : vector<1x32xf32> to vector<256x32xf32>
    %27 = arith.addf %24, %26 : vector<256x32xf32>
    %28 = math.tanh %27 : vector<256x32xf32>
    %c0_16 = arith.constant 0 : index
    %c0_17 = arith.constant 0 : index
    %29 = vector.load %arg9[%c0_16, %c0_17] : memref<32x96xf32, #tpu.memory_space<vmem>>, vector<32x96xf32>
    %cst_18 = arith.constant dense<0.000000e+00> : vector<256x96xf32>
    %30 = tpu.matmul %28, %29, %cst_18 {dimension_numbers = #tpu.dot_dimension_numbers<[1], [0], [0], [1], [0, 0, 1, 1], [], []>} : vector<256x32xf32>, vector<32x96xf32>, vector<256x96xf32> -> vector<256x96xf32>
    %c0_19 = arith.constant 0 : index
    %c0_20 = arith.constant 0 : index
    %31 = vector.load %arg10[%c0_19, %c0_20] : memref<1x96xf32, #tpu.memory_space<vmem>>, vector<1x96xf32>
    %32 = vector.broadcast %31 : vector<1x96xf32> to vector<256x96xf32>
    %33 = arith.addf %30, %32 : vector<256x96xf32>
    %34 = arith.mulf %21, %33 : vector<256x96xf32>
    %c0_21 = arith.constant 0 : index
    %c0_22 = arith.constant 0 : index
    %35 = vector.load %arg11[%c0_21, %c0_22] : memref<96x128xf32, #tpu.memory_space<vmem>>, vector<96x128xf32>
    %cst_23 = arith.constant dense<0.000000e+00> : vector<256x128xf32>
    %36 = tpu.matmul %34, %35, %cst_23 {dimension_numbers = #tpu.dot_dimension_numbers<[1], [0], [0], [1], [0, 0, 1, 1], [], []>} : vector<256x96xf32>, vector<96x128xf32>, vector<256x128xf32> -> vector<256x128xf32>
    %c0_24 = arith.constant 0 : index
    %c0_25 = arith.constant 0 : index
    %37 = vector.load %arg12[%c0_24, %c0_25] : memref<256x128xf32, #tpu.memory_space<vmem>>, vector<256x128xf32>
    tpu.vector_store %arg12[%c0_24, %c0_25], %36 {strides = array<i32>} : memref<256x128xf32, #tpu.memory_space<vmem>>, vector<256x128xf32>,
    return
  }
  func.func @transform_0(%arg0: i32) -> (i32, i32) {
    %c0_i32 = arith.constant 0 : i32
    %c0_i32_0 = arith.constant 0 : i32
    return %arg0, %c0_i32 : i32, i32
  }
  func.func @transform_1(%arg0: i32) -> (i32, i32) {
    %c0_i32 = arith.constant 0 : i32
    %c0_i32_0 = arith.constant 0 : i32
    return %arg0, %c0_i32 : i32, i32
  }
  func.func @transform_2(%arg0: i32) -> (i32, i32) {
    %c0_i32 = arith.constant 0 : i32
    %c0_i32_0 = arith.constant 0 : i32
    %c0_i32_1 = arith.constant 0 : i32
    return %c0_i32, %c0_i32_0 : i32, i32
  }
  func.func @transform_3(%arg0: i32) -> (i32, i32) {
    %c0_i32 = arith.constant 0 : i32
    %c0_i32_0 = arith.constant 0 : i32
    %c0_i32_1 = arith.constant 0 : i32
    return %c0_i32, %c0_i32_0 : i32, i32
  }
  func.func @transform_4(%arg0: i32) -> (i32, i32) {
    %c0_i32 = arith.constant 0 : i32
    %c0_i32_0 = arith.constant 0 : i32
    %c0_i32_1 = arith.constant 0 : i32
    return %c0_i32, %c0_i32_0 : i32, i32
  }
  func.func @transform_5(%arg0: i32) -> (i32, i32) {
    %c0_i32 = arith.constant 0 : i32
    %c0_i32_0 = arith.constant 0 : i32
    %c0_i32_1 = arith.constant 0 : i32
    return %c0_i32, %c0_i32_0 : i32, i32
  }
  func.func @transform_6(%arg0: i32) -> (i32, i32) {
    %c0_i32 = arith.constant 0 : i32
    %c0_i32_0 = arith.constant 0 : i32
    %c0_i32_1 = arith.constant 0 : i32
    return %c0_i32, %c0_i32_0 : i32, i32
  }
  func.func @transform_7(%arg0: i32) -> (i32, i32) {
    %c0_i32 = arith.constant 0 : i32
    %c0_i32_0 = arith.constant 0 : i32
    %c0_i32_1 = arith.constant 0 : i32
    return %c0_i32, %c0_i32_0 : i32, i32
  }
  func.func @transform_8(%arg0: i32) -> (i32, i32) {
    %c0_i32 = arith.constant 0 : i32
    %c0_i32_0 = arith.constant 0 : i32
    %c0_i32_1 = arith.constant 0 : i32
    return %c0_i32, %c0_i32_0 : i32, i32
  }
  func.func @transform_9(%arg0: i32) -> (i32, i32) {
    %c0_i32 = arith.constant 0 : i32
    %c0_i32_0 = arith.constant 0 : i32
    %c0_i32_1 = arith.constant 0 : i32
    return %c0_i32, %c0_i32_0 : i32, i32
  }
  func.func @transform_10(%arg0: i32) -> (i32, i32) {
    %c0_i32 = arith.constant 0 : i32
    %c0_i32_0 = arith.constant 0 : i32
    %c0_i32_1 = arith.constant 0 : i32
    return %c0_i32, %c0_i32_0 : i32, i32
  }
  func.func @transform_11(%arg0: i32) -> (i32, i32) {
    %c0_i32 = arith.constant 0 : i32
    %c0_i32_0 = arith.constant 0 : i32
    return %arg0, %c0_i32 : i32, i32
  }
}

</mosaic_0001>

<llo_original>
// kernel: tpu_custom_call.1
$region0: #{tpu_custom_call.1}
  #allocation0 [shape = 'u32[]', space=smem, size = 0x4, offset = 0x4, fixed_abs, tag = 'smem constant byte address 0x4 - core index']
  #allocation1 [shape = 'u32[72,128]{1,0:T(1,128)}', space=vmem, size = 0x9000, scoped, tag = 'internal scratch']
  %s0 = inlined_call_operand.vmem [shape: f32[512,2], index: 0, kind: input, shape index: {}]
  %s1 = inlined_call_operand.vmem [shape: f32[512,16], index: 1, kind: input, shape index: {}]
  %s2 = inlined_call_operand.vmem [shape: f32[2,32], index: 2, kind: input, shape index: {}]
  %s3 = inlined_call_operand.vmem [shape: f32[1,32], index: 3, kind: input, shape index: {}]
  %s4 = inlined_call_operand.vmem [shape: f32[32,96], index: 4, kind: input, shape index: {}]
  %s5 = inlined_call_operand.vmem [shape: f32[1,96], index: 5, kind: input, shape index: {}]
  %s6 = inlined_call_operand.vmem [shape: f32[16,32], index: 6, kind: input, shape index: {}]
  %s7 = inlined_call_operand.vmem [shape: f32[1,32], index: 7, kind: input, shape index: {}]
  %s8 = inlined_call_operand.vmem [shape: f32[32,96], index: 8, kind: input, shape index: {}]
  %s9 = inlined_call_operand.vmem [shape: f32[1,96], index: 9, kind: input, shape index: {}]
  %s10 = inlined_call_operand.vmem [shape: f32[96,128], index: 10, kind: input, shape index: {}]
  %s11 = inlined_call_operand.hbm [shape: f32[512,128], index: 11, kind: output, shape index: {}]
  %s12 = sld [smem:[#allocation0]]
  $region77: #{tpu_custom_call.1} parent=0
    _
  %s14 = ssub.s32 1, %s12
  %s15 = scalar_select 0, %s14, %s12
  $region1: #{tpu_custom_call.1} parent=0
    #allocation2 [shape = 'u8[262144]{0}', space=vmem, size = 0x40000, scoped, tag = 'output window, operand 0']
    #allocation3 [shape = 's32[2]{0}', space=sflag, size = 0x8, scoped, tag = 'scoped memory for tpu_custom_call.1']
    %16 = vsyncpa [#allocation3], 0
    %s17 = scalar_lea.sflag [#allocation3], 1
    %18 = vsyncpa %s17, 0
    loop: start=0, step=1, limit=4
    $region2: #{tpu_custom_call.1} parent=1 // loop_pre_header
      _
    $region3: #{tpu_custom_call.1} parent=1 // loop_header
      %s20 = sphi 0, %s24
      %p21 = scmp.ge.s32.totalorder %s20, 4
      %s30 = sphi 0, %s32
      %s33 = sphi 0, %s30
      %s34 = sphi 0, %s33
      %s50 = sphi 0, %s34
      %s56 = sphi 0, %s58
      %s59 = sphi 0, %s56
      %s60 = sphi 0, %s59
      %s76 = sphi 0, %s60
      %s80 = sphi 0, %s80
      %s82 = sphi 0, %s80
      %s83 = sphi 0, %s82
      %s97 = sphi 0, %s83
      %s101 = sphi 0, %s101
      %s103 = sphi 0, %s101
      %s104 = sphi 0, %s103
      %s118 = sphi 0, %s104
      %s122 = sphi 0, %s122
      %s124 = sphi 0, %s122
      %s125 = sphi 0, %s124
      %s139 = sphi 0, %s125
      %s143 = sphi 0, %s143
      %s145 = sphi 0, %s143
      %s146 = sphi 0, %s145
      %s160 = sphi 0, %s146
      %s164 = sphi 0, %s164
      %s166 = sphi 0, %s164
      %s167 = sphi 0, %s166
      %s181 = sphi 0, %s167
      %s185 = sphi 0, %s185
      %s187 = sphi 0, %s185
      %s188 = sphi 0, %s187
      %s202 = sphi 0, %s188
      %s206 = sphi 0, %s206
      %s208 = sphi 0, %s206
      %s209 = sphi 0, %s208
      %s223 = sphi 0, %s209
      %s227 = sphi 0, %s227
      %s229 = sphi 0, %s227
      %s230 = sphi 0, %s229
      %s244 = sphi 0, %s230
      %s248 = sphi 0, %s248
      %s250 = sphi 0, %s248
      %s251 = sphi 0, %s250
      %s265 = sphi 0, %s251
      %s271 = sphi 0, %s273
      %s274 = sphi 0, %s271
      %s275 = sphi 0, %s274
      %s291 = sphi 0, %s275
    $region4: #{tpu_custom_call.1} parent=1 // loop_header_branch
      %23 = sbr.rel (%p21) target = $region8
    $region5: #{tpu_custom_call.1} parent=1 // loop_body
      %s25 = ssub.s32 %s20, 1
      %s26 = ssub.s32 %s20, 2
      %s27 = sadd.s32 %s20, 1
      %s28 = ssub.s32 %s20, %s27
      %p29 = scmp.eq.s32.totalorder %s28, 0
      %s31 = sadd.s32 %s30, 1
      %s32 = scalar_select %p29, %s30, %s31
      %p35 = pneg %p29
      %p36 = scmp.eq.s32.totalorder %s20, 1
      %p37 = por %p35, %p36
      %p38 = scmp.ne.s32.totalorder %s30, %s33
      %p39 = scmp.eq.s32.totalorder %s20, 0
      %p40 = por %p38, %p39
      %p41 = scmp.ne.s32.totalorder %s30, %s33
      %p42 = scmp.eq.s32.totalorder %s25, 1
      %p43 = por %p41, %p42
      %p44 = scmp.ne.s32.totalorder %s33, %s34
      %p45 = scmp.eq.s32.totalorder %s25, 0
      %p46 = por %p44, %p45
      %p47 = scmp.ne.s32.totalorder %s33, %s34
      %p48 = scmp.eq.s32.totalorder %s26, 1
      %p49 = por %p47, %p48
      %p51 = scmp.ne.s32.totalorder %s34, %s50
      %p52 = scmp.eq.s32.totalorder %s26, 0
      %p53 = por %p51, %p52
      %s54 = ssub.s32 %s20, %s27
      %p55 = scmp.eq.s32.totalorder %s54, 0
      %s57 = sadd.s32 %s56, 1
      %s58 = scalar_select %p55, %s56, %s57
      %p61 = pneg %p55
      %p62 = scmp.eq.s32.totalorder %s20, 1
      %p63 = por %p61, %p62
      %p64 = scmp.ne.s32.totalorder %s56, %s59
      %p65 = scmp.eq.s32.totalorder %s20, 0
      %p66 = por %p64, %p65
      %p67 = scmp.ne.s32.totalorder %s56, %s59
      %p68 = scmp.eq.s32.totalorder %s25, 1
      %p69 = por %p67, %p68
      %p70 = scmp.ne.s32.totalorder %s59, %s60
      %p71 = scmp.eq.s32.totalorder %s25, 0
      %p72 = por %p70, %p71
      %p73 = scmp.ne.s32.totalorder %s59, %s60
      %p74 = scmp.eq.s32.totalorder %s26, 1
      %p75 = por %p73, %p74
      %p77 = scmp.ne.s32.totalorder %s60, %s76
      %p78 = scmp.eq.s32.totalorder %s26, 0
      %p79 = por %p77, %p78
      %s81 = sadd.s32 %s80, 1
      %p84 = scmp.eq.s32.totalorder %s20, 1
      %p85 = scmp.ne.s32.totalorder %s80, %s82
      %p86 = scmp.eq.s32.totalorder %s20, 0
      %p87 = por %p85, %p86
      %p88 = scmp.ne.s32.totalorder %s80, %s82
      %p89 = scmp.eq.s32.totalorder %s25, 1
      %p90 = por %p88, %p89
      %p91 = scmp.ne.s32.totalorder %s82, %s83
      %p92 = scmp.eq.s32.totalorder %s25, 0
      %p93 = por %p91, %p92
      %p94 = scmp.ne.s32.totalorder %s82, %s83
      %p95 = scmp.eq.s32.totalorder %s26, 1
      %p96 = por %p94, %p95
      %p98 = scmp.ne.s32.totalorder %s83, %s97
      %p99 = scmp.eq.s32.totalorder %s26, 0
      %p100 = por %p98, %p99
      %s102 = sadd.s32 %s101, 1
      %p105 = scmp.eq.s32.totalorder %s20, 1
      %p106 = scmp.ne.s32.totalorder %s101, %s103
      %p107 = scmp.eq.s32.totalorder %s20, 0
      %p108 = por %p106, %p107
      %p109 = scmp.ne.s32.totalorder %s101, %s103
      %p110 = scmp.eq.s32.totalorder %s25, 1
      %p111 = por %p109, %p110
      %p112 = scmp.ne.s32.totalorder %s103, %s104
      %p113 = scmp.eq.s32.totalorder %s25, 0
      %p114 = por %p112, %p113
      %p115 = scmp.ne.s32.totalorder %s103, %s104
      %p116 = scmp.eq.s32.totalorder %s26, 1
      %p117 = por %p115, %p116
      %p119 = scmp.ne.s32.totalorder %s104, %s118
      %p120 = scmp.eq.s32.totalorder %s26, 0
      %p121 = por %p119, %p120
      %s123 = sadd.s32 %s122, 1
      %p126 = scmp.eq.s32.totalorder %s20, 1
      %p127 = scmp.ne.s32.totalorder %s122, %s124
      %p128 = scmp.eq.s32.totalorder %s20, 0
      %p129 = por %p127, %p128
      %p130 = scmp.ne.s32.totalorder %s122, %s124
      %p131 = scmp.eq.s32.totalorder %s25, 1
      %p132 = por %p130, %p131
      %p133 = scmp.ne.s32.totalorder %s124, %s125
      %p134 = scmp.eq.s32.totalorder %s25, 0
      %p135 = por %p133, %p134
      %p136 = scmp.ne.s32.totalorder %s124, %s125
      %p137 = scmp.eq.s32.totalorder %s26, 1
      %p138 = por %p136, %p137
      %p140 = scmp.ne.s32.totalorder %s125, %s139
      %p141 = scmp.eq.s32.totalorder %s26, 0
      %p142 = por %p140, %p141
      %s144 = sadd.s32 %s143, 1
      %p147 = scmp.eq.s32.totalorder %s20, 1
      %p148 = scmp.ne.s32.totalorder %s143, %s145
      %p149 = scmp.eq.s32.totalorder %s20, 0
      %p150 = por %p148, %p149
      %p151 = scmp.ne.s32.totalorder %s143, %s145
      %p152 = scmp.eq.s32.totalorder %s25, 1
      %p153 = por %p151, %p152
      %p154 = scmp.ne.s32.totalorder %s145, %s146
      %p155 = scmp.eq.s32.totalorder %s25, 0
      %p156 = por %p154, %p155
      %p157 = scmp.ne.s32.totalorder %s145, %s146
      %p158 = scmp.eq.s32.totalorder %s26, 1
      %p159 = por %p157, %p158
      %p161 = scmp.ne.s32.totalorder %s146, %s160
      %p162 = scmp.eq.s32.totalorder %s26, 0
      %p163 = por %p161, %p162
      %s165 = sadd.s32 %s164, 1
      %p168 = scmp.eq.s32.totalorder %s20, 1
      %p169 = scmp.ne.s32.totalorder %s164, %s166
      %p170 = scmp.eq.s32.totalorder %s20, 0
      %p171 = por %p169, %p170
      %p172 = scmp.ne.s32.totalorder %s164, %s166
      %p173 = scmp.eq.s32.totalorder %s25, 1
      %p174 = por %p172, %p173
      %p175 = scmp.ne.s32.totalorder %s166, %s167
      %p176 = scmp.eq.s32.totalorder %s25, 0
      %p177 = por %p175, %p176
      %p178 = scmp.ne.s32.totalorder %s166, %s167
      %p179 = scmp.eq.s32.totalorder %s26, 1
      %p180 = por %p178, %p179
      %p182 = scmp.ne.s32.totalorder %s167, %s181
      %p183 = scmp.eq.s32.totalorder %s26, 0
      %p184 = por %p182, %p183
      %s186 = sadd.s32 %s185, 1
      %p189 = scmp.eq.s32.totalorder %s20, 1
      %p190 = scmp.ne.s32.totalorder %s185, %s187
      %p191 = scmp.eq.s32.totalorder %s20, 0
      %p192 = por %p190, %p191
      %p193 = scmp.ne.s32.totalorder %s185, %s187
      %p194 = scmp.eq.s32.totalorder %s25, 1
      %p195 = por %p193, %p194
      %p196 = scmp.ne.s32.totalorder %s187, %s188
      %p197 = scmp.eq.s32.totalorder %s25, 0
      %p198 = por %p196, %p197
      %p199 = scmp.ne.s32.totalorder %s187, %s188
      %p200 = scmp.eq.s32.totalorder %s26, 1
      %p201 = por %p199, %p200
      %p203 = scmp.ne.s32.totalorder %s188, %s202
      %p204 = scmp.eq.s32.totalorder %s26, 0
      %p205 = por %p203, %p204
      %s207 = sadd.s32 %s206, 1
      %p210 = scmp.eq.s32.totalorder %s20, 1
      %p211 = scmp.ne.s32.totalorder %s206, %s208
      %p212 = scmp.eq.s32.totalorder %s20, 0
      %p213 = por %p211, %p212
      %p214 = scmp.ne.s32.totalorder %s206, %s208
      %p215 = scmp.eq.s32.totalorder %s25, 1
      %p216 = por %p214, %p215
      %p217 = scmp.ne.s32.totalorder %s208, %s209
      %p218 = scmp.eq.s32.totalorder %s25, 0
      %p219 = por %p217, %p218
      %p220 = scmp.ne.s32.totalorder %s208, %s209
      %p221 = scmp.eq.s32.totalorder %s26, 1
      %p222 = por %p220, %p221
      %p224 = scmp.ne.s32.totalorder %s209, %s223
      %p225 = scmp.eq.s32.totalorder %s26, 0
      %p226 = por %p224, %p225
      %s228 = sadd.s32 %s227, 1
      %p231 = scmp.eq.s32.totalorder %s20, 1
      %p232 = scmp.ne.s32.totalorder %s227, %s229
      %p233 = scmp.eq.s32.totalorder %s20, 0
      %p234 = por %p232, %p233
      %p235 = scmp.ne.s32.totalorder %s227, %s229
      %p236 = scmp.eq.s32.totalorder %s25, 1
      %p237 = por %p235, %p236
      %p238 = scmp.ne.s32.totalorder %s229, %s230
      %p239 = scmp.eq.s32.totalorder %s25, 0
      %p240 = por %p238, %p239
      %p241 = scmp.ne.s32.totalorder %s229, %s230
      %p242 = scmp.eq.s32.totalorder %s26, 1
      %p243 = por %p241, %p242
      %p245 = scmp.ne.s32.totalorder %s230, %s244
      %p246 = scmp.eq.s32.totalorder %s26, 0
      %p247 = por %p245, %p246
      %s249 = sadd.s32 %s248, 1
      %p252 = scmp.eq.s32.totalorder %s20, 1
      %p253 = scmp.ne.s32.totalorder %s248, %s250
      %p254 = scmp.eq.s32.totalorder %s20, 0
      %p255 = por %p253, %p254
      %p256 = scmp.ne.s32.totalorder %s248, %s250
      %p257 = scmp.eq.s32.totalorder %s25, 1
      %p258 = por %p256, %p257
      %p259 = scmp.ne.s32.totalorder %s250, %s251
      %p260 = scmp.eq.s32.totalorder %s25, 0
      %p261 = por %p259, %p260
      %p262 = scmp.ne.s32.totalorder %s250, %s251
      %p263 = scmp.eq.s32.totalorder %s26, 1
      %p264 = por %p262, %p263
      %p266 = scmp.ne.s32.totalorder %s251, %s265
      %p267 = scmp.eq.s32.totalorder %s26, 0
      %p268 = por %p266, %p267
      %s269 = ssub.s32 %s20, %s27
      %p270 = scmp.eq.s32.totalorder %s269, 0
      %s272 = sadd.s32 %s271, 1
      %s273 = scalar_select %p270, %s271, %s272
      %p276 = pneg %p270
      %p277 = scmp.eq.s32.totalorder %s20, 1
      %p278 = por %p276, %p277
      %p279 = scmp.ne.s32.totalorder %s271, %s274
      %p280 = scmp.eq.s32.totalorder %s20, 0
      %p281 = por %p279, %p280
      %p282 = scmp.ne.s32.totalorder %s271, %s274
      %p283 = scmp.eq.s32.totalorder %s25, 1
      %p284 = por %p282, %p283
      %p285 = scmp.ne.s32.totalorder %s274, %s275
      %p286 = scmp.eq.s32.totalorder %s25, 0
      %p287 = por %p285, %p286
      %p288 = scmp.ne.s32.totalorder %s274, %s275
      %p289 = scmp.eq.s32.totalorder %s26, 1
      %p290 = por %p288, %p289
      %p292 = scmp.ne.s32.totalorder %s275, %s291
      %p293 = scmp.eq.s32.totalorder %s26, 0
      %p294 = por %p292, %p293
      %p295 = scmp.le.s32.totalorder 1, %s20
      %p296 = scmp.lt.s32.totalorder %s20, 3
      %p297 = pnand %p295, %p296
      %p298 = pneg %p297
      // Predicated region
      $region9: #{tpu_custom_call.1} parent=5 // pred_check
        _
      $region10: #{tpu_custom_call.1} parent=5 // pred_check_branch
        %300 = sbr.rel (%p297) target = $region12
      $region11: #{tpu_custom_call.1} parent=5 // pred_region
        %s301 = ssub.s32 %s20, 1
        // Predicated region
        $region13: #{tpu_custom_call.1} parent=11 // pred_check
          %p302 = pneg %p93
        $region14: #{tpu_custom_call.1} parent=11 // pred_check_branch
          %304 = sbr.rel (%p302) target = $region16
        $region15: #{tpu_custom_call.1} parent=11 // pred_region
          _
        $region16: #{tpu_custom_call.1} parent=11 // pred_fallthru
          _
        // Predicated region
        $region17: #{tpu_custom_call.1} parent=11 // pred_check
          %p305 = pneg %p114
        $region18: #{tpu_custom_call.1} parent=11 // pred_check_branch
          %307 = sbr.rel (%p305) target = $region20
        $region19: #{tpu_custom_call.1} parent=11 // pred_region
          _
        $region20: #{tpu_custom_call.1} parent=11 // pred_fallthru
          _
        // Predicated region
        $region21: #{tpu_custom_call.1} parent=11 // pred_check
          %p308 = pneg %p135
        $region22: #{tpu_custom_call.1} parent=11 // pred_check_branch
          %310 = sbr.rel (%p308) target = $region24
        $region23: #{tpu_custom_call.1} parent=11 // pred_region
          _
        $region24: #{tpu_custom_call.1} parent=11 // pred_fallthru
          _
        // Predicated region
        $region25: #{tpu_custom_call.1} parent=11 // pred_check
          %p311 = pneg %p156
        $region26: #{tpu_custom_call.1} parent=11 // pred_check_branch
          %313 = sbr.rel (%p311) target = $region28
        $region27: #{tpu_custom_call.1} parent=11 // pred_region
          _
        $region28: #{tpu_custom_call.1} parent=11 // pred_fallthru
          _
        // Predicated region
        $region29: #{tpu_custom_call.1} parent=11 // pred_check
          %p314 = pneg %p177
        $region30: #{tpu_custom_call.1} parent=11 // pred_check_branch
          %316 = sbr.rel (%p314) target = $region32
        $region31: #{tpu_custom_call.1} parent=11 // pred_region
          _
        $region32: #{tpu_custom_call.1} parent=11 // pred_fallthru
          _
        // Predicated region
        $region33: #{tpu_custom_call.1} parent=11 // pred_check
          %p317 = pneg %p198
        $region34: #{tpu_custom_call.1} parent=11 // pred_check_branch
          %319 = sbr.rel (%p317) target = $region36
        $region35: #{tpu_custom_call.1} parent=11 // pred_region
          _
        $region36: #{tpu_custom_call.1} parent=11 // pred_fallthru
          _
        // Predicated region
        $region37: #{tpu_custom_call.1} parent=11 // pred_check
          %p320 = pneg %p219
        $region38: #{tpu_custom_call.1} parent=11 // pred_check_branch
          %322 = sbr.rel (%p320) target = $region40
        $region39: #{tpu_custom_call.1} parent=11 // pred_region
          _
        $region40: #{tpu_custom_call.1} parent=11 // pred_fallthru
          _
        // Predicated region
        $region41: #{tpu_custom_call.1} parent=11 // pred_check
          %p323 = pneg %p240
        $region42: #{tpu_custom_call.1} parent=11 // pred_check_branch
          %325 = sbr.rel (%p323) target = $region44
        $region43: #{tpu_custom_call.1} parent=11 // pred_region
          _
        $region44: #{tpu_custom_call.1} parent=11 // pred_fallthru
          _
        // Predicated region
        $region45: #{tpu_custom_call.1} parent=11 // pred_check
          %p326 = pneg %p261
        $region46: #{tpu_custom_call.1} parent=11 // pred_check_branch
          %328 = sbr.rel (%p326) target = $region48
        $region47: #{tpu_custom_call.1} parent=11 // pred_region
          _
        $region48: #{tpu_custom_call.1} parent=11 // pred_fallthru
          _
      $region12: #{tpu_custom_call.1} parent=5 // pred_fallthru
        _
      %p329 = scmp.lt.s32.totalorder %s20, 2
      // Predicated region
      $region49: #{tpu_custom_call.1} parent=5 // pred_check
        %p330 = pneg %p329
      $region50: #{tpu_custom_call.1} parent=5 // pred_check_branch
        %332 = sbr.rel (%p330) target = $region52
      $region51: #{tpu_custom_call.1} parent=5 // pred_region
        // Predicated region
        $region53: #{tpu_custom_call.1} parent=51 // pred_check
          %p333 = pneg %p40
        $region54: #{tpu_custom_call.1} parent=51 // pred_check_branch
          %335 = sbr.rel (%p333) target = $region56
        $region55: #{tpu_custom_call.1} parent=51 // pred_region
          %s336 = smul.u32 32, %s20
          %p337 = scmp.lt.s32.totalorder %s336, 63
          %s338 = scalar_select %p337, %s336, 63
          %s339 = smul.addr %s338, 8
          %s340 = scalar_lea.vmem %s0, %s339
          %s341 = smul.u32 32, %s20
        $region56: #{tpu_custom_call.1} parent=51 // pred_fallthru
          _
        // Predicated region
        $region57: #{tpu_custom_call.1} parent=51 // pred_check
          %p342 = pneg %p66
        $region58: #{tpu_custom_call.1} parent=51 // pred_check_branch
          %344 = sbr.rel (%p342) target = $region60
        $region59: #{tpu_custom_call.1} parent=51 // pred_region
          %s345 = smul.u32 32, %s20
          %p346 = scmp.lt.s32.totalorder %s345, 63
          %s347 = scalar_select %p346, %s345, 63
          %s348 = smul.addr %s347, 8
          %s349 = scalar_lea.vmem %s1, %s348
          %s350 = smul.u32 32, %s20
        $region60: #{tpu_custom_call.1} parent=51 // pred_fallthru
          _
      $region52: #{tpu_custom_call.1} parent=5 // pred_fallthru
        _
      %p351 = scmp.le.s32.totalorder 1, %s20
      %p352 = scmp.lt.s32.totalorder %s20, 3
      %p353 = pnand %p351, %p352
      %p354 = pneg %p353
      // Predicated region
      $region61: #{tpu_custom_call.1} parent=5 // pred_check
        _
      $region62: #{tpu_custom_call.1} parent=5 // pred_check_branch
        %356 = sbr.rel (%p353) target = $region64
      $region63: #{tpu_custom_call.1} parent=5 // pred_region
        %s357 = ssub.s32 %s20, 1
        %s358 = smul.u32 32, %s25
        %p359 = scmp.lt.s32.totalorder %s358, 63
        %s360 = scalar_select %p359, %s358, 63
        %s361 = smul.addr %s360, 8
        %s362 = scalar_lea.vmem %s0, %s361
        %p363 = pneg %p46
        %p364 = pneg %p43
        %s365 = smul.u32 32, %s25
        %p366 = scmp.lt.s32.totalorder %s365, 63
        %s367 = scalar_select %p366, %s365, 63
        %s368 = smul.addr %s367, 8
        %s369 = scalar_lea.vmem %s1, %s368
        %p370 = pneg %p72
        %p371 = pneg %p69
        %p372 = pneg %p93
        %p373 = pneg %p90
        %p374 = pneg %p114
        %p375 = pneg %p111
        %p376 = pneg %p135
        %p377 = pneg %p132
        %p378 = pneg %p156
        %p379 = pneg %p153
        %p380 = pneg %p177
        %p381 = pneg %p174
        %p382 = pneg %p198
        %p383 = pneg %p195
        %p384 = pneg %p219
        %p385 = pneg %p216
        %p386 = pneg %p240
        %p387 = pneg %p237
        %p388 = pneg %p261
        %p389 = pneg %p258
        %p390 = pneg %p287
        %p391 = pneg %p284
        %s392 = sand.u32 %s274, 1
        %s393 = scalar_lea.sflag [#allocation3], %s392
        %s394 = sand.u32 %s274, 1
        %s395 = smul.addr %s394, 256
        %s396 = scalar_lea.vmem [#allocation2], %s395
        %s397 = smul.u32 32, %s25
        %p398 = scmp.lt.s32.totalorder %s397, 63
        %s399 = scalar_select %p398, %s397, 63
        %s400 = smul.addr %s399, 8
        %s401 = scalar_lea.vmem %s0, %s400
        %s402 = smul.u32 32, %s25
        %s403 = smul.u32 32, %s25
        %p404 = scmp.lt.s32.totalorder %s403, 63
        %s405 = scalar_select %p404, %s403, 63
        %s406 = smul.addr %s405, 8
        %s407 = scalar_lea.vmem %s1, %s406
        %s408 = smul.u32 32, %s25
        %s409 = smul.u32 32, %s25
        %v410 = vld [vmem:[%s401] sm:$0xff]
        %v411 = vld [vmem:[%s401 + $0x8] sm:$0xff]
        %v412 = vld [vmem:[%s401 + $0x10] sm:$0xff]
        %v413 = vld [vmem:[%s401 + $0x18] sm:$0xff]
        %v414 = vld [vmem:[%s401 + $0x20] sm:$0xff]
        %v415 = vld [vmem:[%s401 + $0x28] sm:$0xff]
        %v416 = vld [vmem:[%s401 + $0x30] sm:$0xff]
        %v417 = vld [vmem:[%s401 + $0x38] sm:$0xff]
        %v418 = vld [vmem:[%s401 + $0x40] sm:$0xff]
        %v419 = vld [vmem:[%s401 + $0x48] sm:$0xff]
        %v420 = vld [vmem:[%s401 + $0x50] sm:$0xff]
        %v421 = vld [vmem:[%s401 + $0x58] sm:$0xff]
        %v422 = vld [vmem:[%s401 + $0x60] sm:$0xff]
        %v423 = vld [vmem:[%s401 + $0x68] sm:$0xff]
        %v424 = vld [vmem:[%s401 + $0x70] sm:$0xff]
        %v425 = vld [vmem:[%s401 + $0x78] sm:$0xff]
        %v426 = vld [vmem:[%s401 + $0x80] sm:$0xff]
        %v427 = vld [vmem:[%s401 + $0x88] sm:$0xff]
        %v428 = vld [vmem:[%s401 + $0x90] sm:$0xff]
        %v429 = vld [vmem:[%s401 + $0x98] sm:$0xff]
        %v430 = vld [vmem:[%s401 + $0xa0] sm:$0xff]
        %v431 = vld [vmem:[%s401 + $0xa8] sm:$0xff]
        %v432 = vld [vmem:[%s401 + $0xb0] sm:$0xff]
        %v433 = vld [vmem:[%s401 + $0xb8] sm:$0xff]
        %v434 = vld [vmem:[%s401 + $0xc0] sm:$0xff]
        %v435 = vld [vmem:[%s401 + $0xc8] sm:$0xff]
        %v436 = vld [vmem:[%s401 + $0xd0] sm:$0xff]
        %v437 = vld [vmem:[%s401 + $0xd8] sm:$0xff]
        %v438 = vld [vmem:[%s401 + $0xe0] sm:$0xff]
        %v439 = vld [vmem:[%s401 + $0xe8] sm:$0xff]
        %v440 = vld [vmem:[%s401 + $0xf0] sm:$0xff]
        %v441 = vld [vmem:[%s401 + $0xf8] sm:$0xff]
        %v442 = vld [vmem:[%s2] sm:$0x3]
        %v443 = vld [vmem:[%s3] sm:$0x1]
        %445 = vset.pattern.permute.xlu0 0
        %446 = vperm.xlu0 %445, %v410
        %v447 = vpop.permute.xlu0 %446
        %450 = vset.pattern.permute.xlu0 0
        %451 = vperm.xlu0 %450, %v411
        %v452 = vpop.permute.xlu0 %451
        %455 = vset.pattern.permute.xlu0 0
        %456 = vperm.xlu0 %455, %v412
        %v457 = vpop.permute.xlu0 %456
        %460 = vset.pattern.permute.xlu0 0
        %461 = vperm.xlu0 %460, %v413
        %v462 = vpop.permute.xlu0 %461
        %465 = vset.pattern.permute.xlu0 0
        %466 = vperm.xlu0 %465, %v414
        %v467 = vpop.permute.xlu0 %466
        %470 = vset.pattern.permute.xlu0 0
        %471 = vperm.xlu0 %470, %v415
        %v472 = vpop.permute.xlu0 %471
        %475 = vset.pattern.permute.xlu0 0
        %476 = vperm.xlu0 %475, %v416
        %v477 = vpop.permute.xlu0 %476
        %480 = vset.pattern.permute.xlu0 0
        %481 = vperm.xlu0 %480, %v417
        %v482 = vpop.permute.xlu0 %481
        %485 = vset.pattern.permute.xlu0 0
        %486 = vperm.xlu0 %485, %v418
        %v487 = vpop.permute.xlu0 %486
        %490 = vset.pattern.permute.xlu0 0
        %491 = vperm.xlu0 %490, %v419
        %v492 = vpop.permute.xlu0 %491
        %495 = vset.pattern.permute.xlu0 0
        %496 = vperm.xlu0 %495, %v420
        %v497 = vpop.permute.xlu0 %496
        %500 = vset.pattern.permute.xlu0 0
        %501 = vperm.xlu0 %500, %v421
        %v502 = vpop.permute.xlu0 %501
        %505 = vset.pattern.permute.xlu0 0
        %506 = vperm.xlu0 %505, %v422
        %v507 = vpop.permute.xlu0 %506
        %510 = vset.pattern.permute.xlu0 0
        %511 = vperm.xlu0 %510, %v423
        %v512 = vpop.permute.xlu0 %511
        %515 = vset.pattern.permute.xlu0 0
        %516 = vperm.xlu0 %515, %v424
        %v517 = vpop.permute.xlu0 %516
        %520 = vset.pattern.permute.xlu0 0
        %521 = vperm.xlu0 %520, %v425
        %v522 = vpop.permute.xlu0 %521
        %525 = vset.pattern.permute.xlu0 0
        %526 = vperm.xlu0 %525, %v426
        %v527 = vpop.permute.xlu0 %526
        %530 = vset.pattern.permute.xlu0 0
        %531 = vperm.xlu0 %530, %v427
        %v532 = vpop.permute.xlu0 %531
        %535 = vset.pattern.permute.xlu0 0
        %536 = vperm.xlu0 %535, %v428
        %v537 = vpop.permute.xlu0 %536
        %540 = vset.pattern.permute.xlu0 0
        %541 = vperm.xlu0 %540, %v429
        %v542 = vpop.permute.xlu0 %541
        %545 = vset.pattern.permute.xlu0 0
        %546 = vperm.xlu0 %545, %v430
        %v547 = vpop.permute.xlu0 %546
        %550 = vset.pattern.permute.xlu0 0
        %551 = vperm.xlu0 %550, %v431
        %v552 = vpop.permute.xlu0 %551
        %555 = vset.pattern.permute.xlu0 0
        %556 = vperm.xlu0 %555, %v432
        %v557 = vpop.permute.xlu0 %556
        %560 = vset.pattern.permute.xlu0 0
        %561 = vperm.xlu0 %560, %v433
        %v562 = vpop.permute.xlu0 %561
        %565 = vset.pattern.permute.xlu0 0
        %566 = vperm.xlu0 %565, %v434
        %v567 = vpop.permute.xlu0 %566
        %570 = vset.pattern.permute.xlu0 0
        %571 = vperm.xlu0 %570, %v435
        %v572 = vpop.permute.xlu0 %571
        %575 = vset.pattern.permute.xlu0 0
        %576 = vperm.xlu0 %575, %v436
        %v577 = vpop.permute.xlu0 %576
        %580 = vset.pattern.permute.xlu0 0
        %581 = vperm.xlu0 %580, %v437
        %v582 = vpop.permute.xlu0 %581
        %585 = vset.pattern.permute.xlu0 0
        %586 = vperm.xlu0 %585, %v438
        %v587 = vpop.permute.xlu0 %586
        %590 = vset.pattern.permute.xlu0 0
        %591 = vperm.xlu0 %590, %v439
        %v592 = vpop.permute.xlu0 %591
        %595 = vset.pattern.permute.xlu0 0
        %596 = vperm.xlu0 %595, %v440
        %v597 = vpop.permute.xlu0 %596
        %600 = vset.pattern.permute.xlu0 0
        %601 = vperm.xlu0 %600, %v441
        %v602 = vpop.permute.xlu0 %601
        %v604 = vperm.slane %v442, 0
        %v605 = vmul.f32 %v447, %v604
        %v606 = vmul.f32 %v452, %v604
        %v607 = vmul.f32 %v457, %v604
        %v608 = vmul.f32 %v462, %v604
        %v609 = vmul.f32 %v467, %v604
        %v610 = vmul.f32 %v472, %v604
        %v611 = vmul.f32 %v477, %v604
        %v612 = vmul.f32 %v482, %v604
        %v613 = vmul.f32 %v487, %v604
        %v614 = vmul.f32 %v492, %v604
        %v615 = vmul.f32 %v497, %v604
        %v616 = vmul.f32 %v502, %v604
        %v617 = vmul.f32 %v507, %v604
        %v618 = vmul.f32 %v512, %v604
        %v619 = vmul.f32 %v517, %v604
        %v620 = vmul.f32 %v522, %v604
        %v621 = vmul.f32 %v527, %v604
        %v622 = vmul.f32 %v532, %v604
        %v623 = vmul.f32 %v537, %v604
        %v624 = vmul.f32 %v542, %v604
        %v625 = vmul.f32 %v547, %v604
        %v626 = vmul.f32 %v552, %v604
        %v627 = vmul.f32 %v557, %v604
        %v628 = vmul.f32 %v562, %v604
        %v629 = vmul.f32 %v567, %v604
        %v630 = vmul.f32 %v572, %v604
        %v631 = vmul.f32 %v577, %v604
        %v632 = vmul.f32 %v582, %v604
        %v633 = vmul.f32 %v587, %v604
        %v634 = vmul.f32 %v592, %v604
        %v635 = vmul.f32 %v597, %v604
        %v636 = vmul.f32 %v602, %v604
        %v638 = vperm.slane %v443, 0
        %v640 = vadd.f32 %v638, %v605
        %v641 = vadd.f32 %v638, %v606
        %v642 = vadd.f32 %v638, %v607
        %v643 = vadd.f32 %v638, %v608
        %v644 = vadd.f32 %v638, %v609
        %v645 = vadd.f32 %v638, %v610
        %v646 = vadd.f32 %v638, %v611
        %v647 = vadd.f32 %v638, %v612
        %v648 = vadd.f32 %v638, %v613
        %v649 = vadd.f32 %v638, %v614
        %v650 = vadd.f32 %v638, %v615
        %v651 = vadd.f32 %v638, %v616
        %v652 = vadd.f32 %v638, %v617
        %v653 = vadd.f32 %v638, %v618
        %v654 = vadd.f32 %v638, %v619
        %v655 = vadd.f32 %v638, %v620
        %v656 = vadd.f32 %v638, %v621
        %v657 = vadd.f32 %v638, %v622
        %v658 = vadd.f32 %v638, %v623
        %v659 = vadd.f32 %v638, %v624
        %v660 = vadd.f32 %v638, %v625
        %v661 = vadd.f32 %v638, %v626
        %v662 = vadd.f32 %v638, %v627
        %v663 = vadd.f32 %v638, %v628
        %v664 = vadd.f32 %v638, %v629
        %v665 = vadd.f32 %v638, %v630
        %v666 = vadd.f32 %v638, %v631
        %v667 = vadd.f32 %v638, %v632
        %v668 = vadd.f32 %v638, %v633
        %v669 = vadd.f32 %v638, %v634
        %v670 = vadd.f32 %v638, %v635
        %v671 = vadd.f32 %v638, %v636
        %672 = vset.pattern.permute.xlu0 1
        %673 = vperm.xlu0 %672, %v410
        %v674 = vpop.permute.xlu0 %673
        %676 = vset.pattern.permute.xlu0 1
        %677 = vperm.xlu0 %676, %v411
        %v678 = vpop.permute.xlu0 %677
        %680 = vset.pattern.permute.xlu0 1
        %681 = vperm.xlu0 %680, %v412
        %v682 = vpop.permute.xlu0 %681
        %684 = vset.pattern.permute.xlu0 1
        %685 = vperm.xlu0 %684, %v413
        %v686 = vpop.permute.xlu0 %685
        %688 = vset.pattern.permute.xlu0 1
        %689 = vperm.xlu0 %688, %v414
        %v690 = vpop.permute.xlu0 %689
        %692 = vset.pattern.permute.xlu0 1
        %693 = vperm.xlu0 %692, %v415
        %v694 = vpop.permute.xlu0 %693
        %696 = vset.pattern.permute.xlu0 1
        %697 = vperm.xlu0 %696, %v416
        %v698 = vpop.permute.xlu0 %697
        %700 = vset.pattern.permute.xlu0 1
        %701 = vperm.xlu0 %700, %v417
        %v702 = vpop.permute.xlu0 %701
        %704 = vset.pattern.permute.xlu0 1
        %705 = vperm.xlu0 %704, %v418
        %v706 = vpop.permute.xlu0 %705
        %708 = vset.pattern.permute.xlu0 1
        %709 = vperm.xlu0 %708, %v419
        %v710 = vpop.permute.xlu0 %709
        %712 = vset.pattern.permute.xlu0 1
        %713 = vperm.xlu0 %712, %v420
        %v714 = vpop.permute.xlu0 %713
        %716 = vset.pattern.permute.xlu0 1
        %717 = vperm.xlu0 %716, %v421
        %v718 = vpop.permute.xlu0 %717
        %720 = vset.pattern.permute.xlu0 1
        %721 = vperm.xlu0 %720, %v422
        %v722 = vpop.permute.xlu0 %721
        %724 = vset.pattern.permute.xlu0 1
        %725 = vperm.xlu0 %724, %v423
        %v726 = vpop.permute.xlu0 %725
        %728 = vset.pattern.permute.xlu0 1
        %729 = vperm.xlu0 %728, %v424
        %v730 = vpop.permute.xlu0 %729
        %732 = vset.pattern.permute.xlu0 1
        %733 = vperm.xlu0 %732, %v425
        %v734 = vpop.permute.xlu0 %733
        %736 = vset.pattern.permute.xlu0 1
        %737 = vperm.xlu0 %736, %v426
        %v738 = vpop.permute.xlu0 %737
        %740 = vset.pattern.permute.xlu0 1
        %741 = vperm.xlu0 %740, %v427
        %v742 = vpop.permute.xlu0 %741
        %744 = vset.pattern.permute.xlu0 1
        %745 = vperm.xlu0 %744, %v428
        %v746 = vpop.permute.xlu0 %745
        %748 = vset.pattern.permute.xlu0 1
        %749 = vperm.xlu0 %748, %v429
        %v750 = vpop.permute.xlu0 %749
        %752 = vset.pattern.permute.xlu0 1
        %753 = vperm.xlu0 %752, %v430
        %v754 = vpop.permute.xlu0 %753
        %756 = vset.pattern.permute.xlu0 1
        %757 = vperm.xlu0 %756, %v431
        %v758 = vpop.permute.xlu0 %757
        %760 = vset.pattern.permute.xlu0 1
        %761 = vperm.xlu0 %760, %v432
        %v762 = vpop.permute.xlu0 %761
        %764 = vset.pattern.permute.xlu0 1
        %765 = vperm.xlu0 %764, %v433
        %v766 = vpop.permute.xlu0 %765
        %768 = vset.pattern.permute.xlu0 1
        %769 = vperm.xlu0 %768, %v434
        %v770 = vpop.permute.xlu0 %769
        %772 = vset.pattern.permute.xlu0 1
        %773 = vperm.xlu0 %772, %v435
        %v774 = vpop.permute.xlu0 %773
        %776 = vset.pattern.permute.xlu0 1
        %777 = vperm.xlu0 %776, %v436
        %v778 = vpop.permute.xlu0 %777
        %780 = vset.pattern.permute.xlu0 1
        %781 = vperm.xlu0 %780, %v437
        %v782 = vpop.permute.xlu0 %781
        %784 = vset.pattern.permute.xlu0 1
        %785 = vperm.xlu0 %784, %v438
        %v786 = vpop.permute.xlu0 %785
        %788 = vset.pattern.permute.xlu0 1
        %789 = vperm.xlu0 %788, %v439
        %v790 = vpop.permute.xlu0 %789
        %792 = vset.pattern.permute.xlu0 1
        %793 = vperm.xlu0 %792, %v440
        %v794 = vpop.permute.xlu0 %793
        %796 = vset.pattern.permute.xlu0 1
        %797 = vperm.xlu0 %796, %v441
        %v798 = vpop.permute.xlu0 %797
        %v800 = vperm.slane %v442, 1
        %v801 = vmul.f32 %v674, %v800
        %v802 = vmul.f32 %v678, %v800
        %v803 = vmul.f32 %v682, %v800
        %v804 = vmul.f32 %v686, %v800
        %v805 = vmul.f32 %v690, %v800
        %v806 = vmul.f32 %v694, %v800
        %v807 = vmul.f32 %v698, %v800
        %v808 = vmul.f32 %v702, %v800
        %v809 = vmul.f32 %v706, %v800
        %v810 = vmul.f32 %v710, %v800
        %v811 = vmul.f32 %v714, %v800
        %v812 = vmul.f32 %v718, %v800
        %v813 = vmul.f32 %v722, %v800
        %v814 = vmul.f32 %v726, %v800
        %v815 = vmul.f32 %v730, %v800
        %v816 = vmul.f32 %v734, %v800
        %v817 = vmul.f32 %v738, %v800
        %v818 = vmul.f32 %v742, %v800
        %v819 = vmul.f32 %v746, %v800
        %v820 = vmul.f32 %v750, %v800
        %v821 = vmul.f32 %v754, %v800
        %v822 = vmul.f32 %v758, %v800
        %v823 = vmul.f32 %v762, %v800
        %v824 = vmul.f32 %v766, %v800
        %v825 = vmul.f32 %v770, %v800
        %v826 = vmul.f32 %v774, %v800
        %v827 = vmul.f32 %v778, %v800
        %v828 = vmul.f32 %v782, %v800
        %v829 = vmul.f32 %v786, %v800
        %v830 = vmul.f32 %v790, %v800
        %v831 = vmul.f32 %v794, %v800
        %v832 = vmul.f32 %v798, %v800
        %v833 = vadd.f32 %v640, %v801
        %v834 = vadd.f32 %v641, %v802
        %v835 = vadd.f32 %v642, %v803
        %v836 = vadd.f32 %v643, %v804
        %v837 = vadd.f32 %v644, %v805
        %v838 = vadd.f32 %v645, %v806
        %v839 = vadd.f32 %v646, %v807
        %v840 = vadd.f32 %v647, %v808
        %v841 = vadd.f32 %v648, %v809
        %v842 = vadd.f32 %v649, %v810
        %v843 = vadd.f32 %v650, %v811
        %v844 = vadd.f32 %v651, %v812
        %v845 = vadd.f32 %v652, %v813
        %v846 = vadd.f32 %v653, %v814
        %v847 = vadd.f32 %v654, %v815
        %v848 = vadd.f32 %v655, %v816
        %v849 = vadd.f32 %v656, %v817
        %v850 = vadd.f32 %v657, %v818
        %v851 = vadd.f32 %v658, %v819
        %v852 = vadd.f32 %v659, %v820
        %v853 = vadd.f32 %v660, %v821
        %v854 = vadd.f32 %v661, %v822
        %v855 = vadd.f32 %v662, %v823
        %v856 = vadd.f32 %v663, %v824
        %v857 = vadd.f32 %v664, %v825
        %v858 = vadd.f32 %v665, %v826
        %v859 = vadd.f32 %v666, %v827
        %v860 = vadd.f32 %v667, %v828
        %v861 = vadd.f32 %v668, %v829
        %v862 = vadd.f32 %v669, %v830
        %v863 = vadd.f32 %v670, %v831
        %v864 = vadd.f32 %v671, %v832
        %v865 = vtanh.pop %v833
        %v866 = vtanh.pop %v834
        %v867 = vtanh.pop %v835
        %v868 = vtanh.pop %v836
        %v869 = vtanh.pop %v837
        %v870 = vtanh.pop %v838
        %v871 = vtanh.pop %v839
        %v872 = vtanh.pop %v840
        %v873 = vtanh.pop %v841
        %v874 = vtanh.pop %v842
        %v875 = vtanh.pop %v843
        %v876 = vtanh.pop %v844
        %v877 = vtanh.pop %v845
        %v878 = vtanh.pop %v846
        %v879 = vtanh.pop %v847
        %v880 = vtanh.pop %v848
        %v881 = vtanh.pop %v849
        %v882 = vtanh.pop %v850
        %v883 = vtanh.pop %v851
        %v884 = vtanh.pop %v852
        %v885 = vtanh.pop %v853
        %v886 = vtanh.pop %v854
        %v887 = vtanh.pop %v855
        %v888 = vtanh.pop %v856
        %v889 = vtanh.pop %v857
        %v890 = vtanh.pop %v858
        %v891 = vtanh.pop %v859
        %v892 = vtanh.pop %v860
        %v893 = vtanh.pop %v861
        %v894 = vtanh.pop %v862
        %v895 = vtanh.pop %v863
        %v896 = vtanh.pop %v864
        %v897 = vld [vmem:[%s4] sm:$0xff]
        %v898 = vld [vmem:[%s4 + $0x8] sm:$0xff]
        %v899 = vld [vmem:[%s4 + $0x10] sm:$0xff]
        %v900 = vld [vmem:[%s4 + $0x18] sm:$0xff]
        %v901 = vld [vmem:[%s5] sm:$0x1]
        %v903 = vperm.slane %v901, 0
        %vm905 = vcmask 261120
        %v907 = vsel %vm905, %v865, 0
        %v910 = vsel %vm905, %v866, 0
        %v913 = vsel %vm905, %v867, 0
        %v916 = vsel %vm905, %v868, 0
        %v919 = vsel %vm905, %v869, 0
        %v922 = vsel %vm905, %v870, 0
        %v925 = vsel %vm905, %v871, 0
        %v928 = vsel %vm905, %v872, 0
        %v931 = vsel %vm905, %v873, 0
        %v934 = vsel %vm905, %v874, 0
        %v937 = vsel %vm905, %v875, 0
        %v940 = vsel %vm905, %v876, 0
        %v943 = vsel %vm905, %v877, 0
        %v946 = vsel %vm905, %v878, 0
        %v949 = vsel %vm905, %v879, 0
        %v952 = vsel %vm905, %v880, 0
        %v955 = vsel %vm905, %v881, 0
        %v958 = vsel %vm905, %v882, 0
        %v961 = vsel %vm905, %v883, 0
        %v964 = vsel %vm905, %v884, 0
        %v967 = vsel %vm905, %v885, 0
        %v970 = vsel %vm905, %v886, 0
        %v973 = vsel %vm905, %v887, 0
        %v976 = vsel %vm905, %v888, 0
        %v979 = vsel %vm905, %v889, 0
        %v982 = vsel %vm905, %v890, 0
        %v985 = vsel %vm905, %v891, 0
        %v988 = vsel %vm905, %v892, 0
        %v991 = vsel %vm905, %v893, 0
        %v994 = vsel %vm905, %v894, 0
        %v997 = vsel %vm905, %v895, 0
        %v1000 = vsel %vm905, %v896, 0
        %1002 = vmatpush.msra.mxu0 0.0
        %1003 = vmatpush.msra.mxu0 0.0
        %1004 = vmatpush.msra.mxu0 0.0
        %1005 = vmatpush.msra.mxu0 0.0
        %1006 = vmatpush.msra.mxu0 0.0
        %1007 = vmatpush.msra.mxu0 0.0
        %1008 = vmatpush.msra.mxu0 0.0
        %1009 = vmatpush.msra.mxu0 0.0
        %1010 = vmatpush.msra.mxu0 0.0
        %1011 = vmatpush.msra.mxu0 0.0
        %1012 = vmatpush.msra.mxu0 0.0
        %1013 = vmatpush.msra.mxu0 0.0
        %1014 = vmatpush.msra.mxu0 %v900
        %1015 = vmatpush.msra.mxu0 %v899
        %1016 = vmatpush.msra.mxu0 %v898
        %1017 = vmatpush.msra.mxu0 %v897
        %1018 = vmatmul.f32.gmra.mxu0 %v907
        %v1019 = vpop.f32.mrf.mxu0
        %v1020 = vadd.f32 %v903, %v1019
        %1021 = vmatmul.f32.gmra.mxu0 %v910
        %v1022 = vpop.f32.mrf.mxu0
        %v1023 = vadd.f32 %v903, %v1022
        %1024 = vmatmul.f32.gmra.mxu0 %v913
        %v1025 = vpop.f32.mrf.mxu0
        %v1026 = vadd.f32 %v903, %v1025
        %1027 = vmatmul.f32.gmra.mxu0 %v916
        %v1028 = vpop.f32.mrf.mxu0
        %v1029 = vadd.f32 %v903, %v1028
        %1030 = vmatmul.f32.gmra.mxu0 %v919
        %v1031 = vpop.f32.mrf.mxu0
        %v1032 = vadd.f32 %v903, %v1031
        %1033 = vmatmul.f32.gmra.mxu0 %v922
        %v1034 = vpop.f32.mrf.mxu0
        %v1035 = vadd.f32 %v903, %v1034
        %1036 = vmatmul.f32.gmra.mxu0 %v925
        %v1037 = vpop.f32.mrf.mxu0
        %v1038 = vadd.f32 %v903, %v1037
        %1039 = vmatmul.f32.gmra.mxu0 %v928
        %v1040 = vpop.f32.mrf.mxu0
        %v1041 = vadd.f32 %v903, %v1040
        %1042 = vmatmul.f32.gmra.mxu0 %v931
        %v1043 = vpop.f32.mrf.mxu0
        %v1044 = vadd.f32 %v903, %v1043
        %1045 = vmatmul.f32.gmra.mxu0 %v934
        %v1046 = vpop.f32.mrf.mxu0
        %v1047 = vadd.f32 %v903, %v1046
        %1048 = vmatmul.f32.gmra.mxu0 %v937
        %v1049 = vpop.f32.mrf.mxu0
        %v1050 = vadd.f32 %v903, %v1049
        %1051 = vmatmul.f32.gmra.mxu0 %v940
        %v1052 = vpop.f32.mrf.mxu0
        %v1053 = vadd.f32 %v903, %v1052
        %1054 = vmatmul.f32.gmra.mxu0 %v943
        %v1055 = vpop.f32.mrf.mxu0
        %v1056 = vadd.f32 %v903, %v1055
        %1057 = vmatmul.f32.gmra.mxu0 %v946
        %v1058 = vpop.f32.mrf.mxu0
        %v1059 = vadd.f32 %v903, %v1058
        %1060 = vmatmul.f32.gmra.mxu0 %v949
        %v1061 = vpop.f32.mrf.mxu0
        %v1062 = vadd.f32 %v903, %v1061
        %1063 = vmatmul.f32.gmra.mxu0 %v952
        %v1064 = vpop.f32.mrf.mxu0
        %v1065 = vadd.f32 %v903, %v1064
        %1066 = vmatmul.f32.gmra.mxu0 %v955
        %v1067 = vpop.f32.mrf.mxu0
        %v1068 = vadd.f32 %v903, %v1067
        %1069 = vmatmul.f32.gmra.mxu0 %v958
        %v1070 = vpop.f32.mrf.mxu0
        %v1071 = vadd.f32 %v903, %v1070
        %1072 = vmatmul.f32.gmra.mxu0 %v961
        %v1073 = vpop.f32.mrf.mxu0
        %v1074 = vadd.f32 %v903, %v1073
        %1075 = vmatmul.f32.gmra.mxu0 %v964
        %v1076 = vpop.f32.mrf.mxu0
        %v1077 = vadd.f32 %v903, %v1076
        %1078 = vmatmul.f32.gmra.mxu0 %v967
        %v1079 = vpop.f32.mrf.mxu0
        %v1080 = vadd.f32 %v903, %v1079
        %1081 = vmatmul.f32.gmra.mxu0 %v970
        %v1082 = vpop.f32.mrf.mxu0
        %v1083 = vadd.f32 %v903, %v1082
        %1084 = vmatmul.f32.gmra.mxu0 %v973
        %v1085 = vpop.f32.mrf.mxu0
        %v1086 = vadd.f32 %v903, %v1085
        %1087 = vmatmul.f32.gmra.mxu0 %v976
        %v1088 = vpop.f32.mrf.mxu0
        %v1089 = vadd.f32 %v903, %v1088
        %1090 = vmatmul.f32.gmra.mxu0 %v979
        %v1091 = vpop.f32.mrf.mxu0
        %v1092 = vadd.f32 %v903, %v1091
        %1093 = vmatmul.f32.gmra.mxu0 %v982
        %v1094 = vpop.f32.mrf.mxu0
        %v1095 = vadd.f32 %v903, %v1094
        %1096 = vmatmul.f32.gmra.mxu0 %v985
        %v1097 = vpop.f32.mrf.mxu0
        %v1098 = vadd.f32 %v903, %v1097
        %1099 = vmatmul.f32.gmra.mxu0 %v988
        %v1100 = vpop.f32.mrf.mxu0
        %v1101 = vadd.f32 %v903, %v1100
        %1102 = vmatmul.f32.gmra.mxu0 %v991
        %v1103 = vpop.f32.mrf.mxu0
        %v1104 = vadd.f32 %v903, %v1103
        %1105 = vmatmul.f32.gmra.mxu0 %v994
        %v1106 = vpop.f32.mrf.mxu0
        %v1107 = vadd.f32 %v903, %v1106
        %1108 = vmatmul.f32.gmra.mxu0 %v997
        %v1109 = vpop.f32.mrf.mxu0
        %v1110 = vadd.f32 %v903, %v1109
        %1111 = vmatmul.f32.gmra.mxu0 %v1000
        %v1112 = vpop.f32.mrf.mxu0
        %v1113 = vadd.f32 %v903, %v1112
        %1114 = vdwg.mxu0
        %v1115 = vld [vmem:[%s407] sm:$0xff]
        %v1116 = vld [vmem:[%s407 + $0x8] sm:$0xff]
        %v1117 = vld [vmem:[%s407 + $0x10] sm:$0xff]
        %v1118 = vld [vmem:[%s407 + $0x18] sm:$0xff]
        %v1119 = vld [vmem:[%s407 + $0x20] sm:$0xff]
        %v1120 = vld [vmem:[%s407 + $0x28] sm:$0xff]
        %v1121 = vld [vmem:[%s407 + $0x30] sm:$0xff]
        %v1122 = vld [vmem:[%s407 + $0x38] sm:$0xff]
        %v1123 = vld [vmem:[%s407 + $0x40] sm:$0xff]
        %v1124 = vld [vmem:[%s407 + $0x48] sm:$0xff]
        %v1125 = vld [vmem:[%s407 + $0x50] sm:$0xff]
        %v1126 = vld [vmem:[%s407 + $0x58] sm:$0xff]
        %v1127 = vld [vmem:[%s407 + $0x60] sm:$0xff]
        %v1128 = vld [vmem:[%s407 + $0x68] sm:$0xff]
        %v1129 = vld [vmem:[%s407 + $0x70] sm:$0xff]
        %v1130 = vld [vmem:[%s407 + $0x78] sm:$0xff]
        %v1131 = vld [vmem:[%s407 + $0x80] sm:$0xff]
        %v1132 = vld [vmem:[%s407 + $0x88] sm:$0xff]
        %v1133 = vld [vmem:[%s407 + $0x90] sm:$0xff]
        %v1134 = vld [vmem:[%s407 + $0x98] sm:$0xff]
        %v1135 = vld [vmem:[%s407 + $0xa0] sm:$0xff]
        %v1136 = vld [vmem:[%s407 + $0xa8] sm:$0xff]
        %v1137 = vld [vmem:[%s407 + $0xb0] sm:$0xff]
        %v1138 = vld [vmem:[%s407 + $0xb8] sm:$0xff]
        %v1139 = vld [vmem:[%s407 + $0xc0] sm:$0xff]
        %v1140 = vld [vmem:[%s407 + $0xc8] sm:$0xff]
        %v1141 = vld [vmem:[%s407 + $0xd0] sm:$0xff]
        %v1142 = vld [vmem:[%s407 + $0xd8] sm:$0xff]
        %v1143 = vld [vmem:[%s407 + $0xe0] sm:$0xff]
        %v1144 = vld [vmem:[%s407 + $0xe8] sm:$0xff]
        %v1145 = vld [vmem:[%s407 + $0xf0] sm:$0xff]
        %v1146 = vld [vmem:[%s407 + $0xf8] sm:$0xff]
        %v1147 = vld [vmem:[%s6] sm:$0xff]
        %v1148 = vld [vmem:[%s6 + $0x8] sm:$0xff]
        %v1149 = vld [vmem:[%s7] sm:$0x1]
        %v1151 = vperm.slane %v1149, 0
        %vm1153 = vcmask 130048
        %v1155 = vsel %vm1153, %v1115, 0
        %v1158 = vsel %vm1153, %v1116, 0
        %v1161 = vsel %vm1153, %v1117, 0
        %v1164 = vsel %vm1153, %v1118, 0
        %v1167 = vsel %vm1153, %v1119, 0
        %v1170 = vsel %vm1153, %v1120, 0
        %v1173 = vsel %vm1153, %v1121, 0
        %v1176 = vsel %vm1153, %v1122, 0
        %v1179 = vsel %vm1153, %v1123, 0
        %v1182 = vsel %vm1153, %v1124, 0
        %v1185 = vsel %vm1153, %v1125, 0
        %v1188 = vsel %vm1153, %v1126, 0
        %v1191 = vsel %vm1153, %v1127, 0
        %v1194 = vsel %vm1153, %v1128, 0
        %v1197 = vsel %vm1153, %v1129, 0
        %v1200 = vsel %vm1153, %v1130, 0
        %v1203 = vsel %vm1153, %v1131, 0
        %v1206 = vsel %vm1153, %v1132, 0
        %v1209 = vsel %vm1153, %v1133, 0
        %v1212 = vsel %vm1153, %v1134, 0
        %v1215 = vsel %vm1153, %v1135, 0
        %v1218 = vsel %vm1153, %v1136, 0
        %v1221 = vsel %vm1153, %v1137, 0
        %v1224 = vsel %vm1153, %v1138, 0
        %v1227 = vsel %vm1153, %v1139, 0
        %v1230 = vsel %vm1153, %v1140, 0
        %v1233 = vsel %vm1153, %v1141, 0
        %v1236 = vsel %vm1153, %v1142, 0
        %v1239 = vsel %vm1153, %v1143, 0
        %v1242 = vsel %vm1153, %v1144, 0
        %v1245 = vsel %vm1153, %v1145, 0
        %v1248 = vsel %vm1153, %v1146, 0
        %1250 = vmatpush.msra.mxu0 0.0
        %1251 = vmatpush.msra.mxu0 0.0
        %1252 = vmatpush.msra.mxu0 0.0
        %1253 = vmatpush.msra.mxu0 0.0
        %1254 = vmatpush.msra.mxu0 0.0
        %1255 = vmatpush.msra.mxu0 0.0
        %1256 = vmatpush.msra.mxu0 0.0
        %1257 = vmatpush.msra.mxu0 0.0
        %1258 = vmatpush.msra.mxu0 0.0
        %1259 = vmatpush.msra.mxu0 0.0
        %1260 = vmatpush.msra.mxu0 0.0
        %1261 = vmatpush.msra.mxu0 0.0
        %1262 = vmatpush.msra.mxu0 0.0
        %1263 = vmatpush.msra.mxu0 0.0
        %1264 = vmatpush.msra.mxu0 %v1148
        %1265 = vmatpush.msra.mxu0 %v1147
        %1266 = vmatmul.f32.gmra.mxu0 %v1155
        %v1267 = vpop.f32.mrf.mxu0
        %v1268 = vadd.f32 %v1151, %v1267
        %1269 = vmatmul.f32.gmra.mxu0 %v1158
        %v1270 = vpop.f32.mrf.mxu0
        %v1271 = vadd.f32 %v1151, %v1270
        %1272 = vmatmul.f32.gmra.mxu0 %v1161
        %v1273 = vpop.f32.mrf.mxu0
        %v1274 = vadd.f32 %v1151, %v1273
        %1275 = vmatmul.f32.gmra.mxu0 %v1164
        %v1276 = vpop.f32.mrf.mxu0
        %v1277 = vadd.f32 %v1151, %v1276
        %1278 = vmatmul.f32.gmra.mxu0 %v1167
        %v1279 = vpop.f32.mrf.mxu0
        %v1280 = vadd.f32 %v1151, %v1279
        %1281 = vmatmul.f32.gmra.mxu0 %v1170
        %v1282 = vpop.f32.mrf.mxu0
        %v1283 = vadd.f32 %v1151, %v1282
        %1284 = vmatmul.f32.gmra.mxu0 %v1173
        %v1285 = vpop.f32.mrf.mxu0
        %v1286 = vadd.f32 %v1151, %v1285
        %1287 = vmatmul.f32.gmra.mxu0 %v1176
        %v1288 = vpop.f32.mrf.mxu0
        %v1289 = vadd.f32 %v1151, %v1288
        %1290 = vmatmul.f32.gmra.mxu0 %v1179
        %v1291 = vpop.f32.mrf.mxu0
        %v1292 = vadd.f32 %v1151, %v1291
        %1293 = vmatmul.f32.gmra.mxu0 %v1182
        %v1294 = vpop.f32.mrf.mxu0
        %v1295 = vadd.f32 %v1151, %v1294
        %1296 = vmatmul.f32.gmra.mxu0 %v1185
        %v1297 = vpop.f32.mrf.mxu0
        %v1298 = vadd.f32 %v1151, %v1297
        %1299 = vmatmul.f32.gmra.mxu0 %v1188
        %v1300 = vpop.f32.mrf.mxu0
        %v1301 = vadd.f32 %v1151, %v1300
        %1302 = vmatmul.f32.gmra.mxu0 %v1191
        %v1303 = vpop.f32.mrf.mxu0
        %v1304 = vadd.f32 %v1151, %v1303
        %1305 = vmatmul.f32.gmra.mxu0 %v1194
        %v1306 = vpop.f32.mrf.mxu0
        %v1307 = vadd.f32 %v1151, %v1306
        %1308 = vmatmul.f32.gmra.mxu0 %v1197
        %v1309 = vpop.f32.mrf.mxu0
        %v1310 = vadd.f32 %v1151, %v1309
        %1311 = vmatmul.f32.gmra.mxu0 %v1200
        %v1312 = vpop.f32.mrf.mxu0
        %v1313 = vadd.f32 %v1151, %v1312
        %1314 = vmatmul.f32.gmra.mxu0 %v1203
        %v1315 = vpop.f32.mrf.mxu0
        %v1316 = vadd.f32 %v1151, %v1315
        %1317 = vmatmul.f32.gmra.mxu0 %v1206
        %v1318 = vpop.f32.mrf.mxu0
        %v1319 = vadd.f32 %v1151, %v1318
        %1320 = vmatmul.f32.gmra.mxu0 %v1209
        %v1321 = vpop.f32.mrf.mxu0
        %v1322 = vadd.f32 %v1151, %v1321
        %1323 = vmatmul.f32.gmra.mxu0 %v1212
        %v1324 = vpop.f32.mrf.mxu0
        %v1325 = vadd.f32 %v1151, %v1324
        %1326 = vmatmul.f32.gmra.mxu0 %v1215
        %v1327 = vpop.f32.mrf.mxu0
        %v1328 = vadd.f32 %v1151, %v1327
        %1329 = vmatmul.f32.gmra.mxu0 %v1218
        %v1330 = vpop.f32.mrf.mxu0
        %v1331 = vadd.f32 %v1151, %v1330
        %1332 = vmatmul.f32.gmra.mxu0 %v1221
        %v1333 = vpop.f32.mrf.mxu0
        %v1334 = vadd.f32 %v1151, %v1333
        %1335 = vmatmul.f32.gmra.mxu0 %v1224
        %v1336 = vpop.f32.mrf.mxu0
        %v1337 = vadd.f32 %v1151, %v1336
        %1338 = vmatmul.f32.gmra.mxu0 %v1227
        %v1339 = vpop.f32.mrf.mxu0
        %v1340 = vadd.f32 %v1151, %v1339
        %1341 = vmatmul.f32.gmra.mxu0 %v1230
        %v1342 = vpop.f32.mrf.mxu0
        %v1343 = vadd.f32 %v1151, %v1342
        %1344 = vmatmul.f32.gmra.mxu0 %v1233
        %v1345 = vpop.f32.mrf.mxu0
        %v1346 = vadd.f32 %v1151, %v1345
        %1347 = vmatmul.f32.gmra.mxu0 %v1236
        %v1348 = vpop.f32.mrf.mxu0
        %v1349 = vadd.f32 %v1151, %v1348
        %1350 = vmatmul.f32.gmra.mxu0 %v1239
        %v1351 = vpop.f32.mrf.mxu0
        %v1352 = vadd.f32 %v1151, %v1351
        %1353 = vmatmul.f32.gmra.mxu0 %v1242
        %v1354 = vpop.f32.mrf.mxu0
        %v1355 = vadd.f32 %v1151, %v1354
        %1356 = vmatmul.f32.gmra.mxu0 %v1245
        %v1357 = vpop.f32.mrf.mxu0
        %v1358 = vadd.f32 %v1151, %v1357
        %1359 = vmatmul.f32.gmra.mxu0 %v1248
        %v1360 = vpop.f32.mrf.mxu0
        %v1361 = vadd.f32 %v1151, %v1360
        %1362 = vdwg.mxu0
        %v1363 = vtanh.pop %v1268
        %v1364 = vtanh.pop %v1271
        %v1365 = vtanh.pop %v1274
        %v1366 = vtanh.pop %v1277
        %v1367 = vtanh.pop %v1280
        %v1368 = vtanh.pop %v1283
        %v1369 = vtanh.pop %v1286
        %v1370 = vtanh.pop %v1289
        %v1371 = vtanh.pop %v1292
        %v1372 = vtanh.pop %v1295
        %v1373 = vtanh.pop %v1298
        %v1374 = vtanh.pop %v1301
        %v1375 = vtanh.pop %v1304
        %v1376 = vtanh.pop %v1307
        %v1377 = vtanh.pop %v1310
        %v1378 = vtanh.pop %v1313
        %v1379 = vtanh.pop %v1316
        %v1380 = vtanh.pop %v1319
        %v1381 = vtanh.pop %v1322
        %v1382 = vtanh.pop %v1325
        %v1383 = vtanh.pop %v1328
        %v1384 = vtanh.pop %v1331
        %v1385 = vtanh.pop %v1334
        %v1386 = vtanh.pop %v1337
        %v1387 = vtanh.pop %v1340
        %v1388 = vtanh.pop %v1343
        %v1389 = vtanh.pop %v1346
        %v1390 = vtanh.pop %v1349
        %v1391 = vtanh.pop %v1352
        %v1392 = vtanh.pop %v1355
        %v1393 = vtanh.pop %v1358
        %v1394 = vtanh.pop %v1361
        %v1395 = vld [vmem:[%s8] sm:$0xff]
        %v1396 = vld [vmem:[%s8 + $0x8] sm:$0xff]
        %v1397 = vld [vmem:[%s8 + $0x10] sm:$0xff]
        %v1398 = vld [vmem:[%s8 + $0x18] sm:$0xff]
        %v1399 = vld [vmem:[%s9] sm:$0x1]
        %v1401 = vperm.slane %v1399, 0
        %v1404 = vsel %vm905, %v1363, 0
        %v1407 = vsel %vm905, %v1364, 0
        %v1410 = vsel %vm905, %v1365, 0
        %v1413 = vsel %vm905, %v1366, 0
        %v1416 = vsel %vm905, %v1367, 0
        %v1419 = vsel %vm905, %v1368, 0
        %v1422 = vsel %vm905, %v1369, 0
        %v1425 = vsel %vm905, %v1370, 0
        %v1428 = vsel %vm905, %v1371, 0
        %v1431 = vsel %vm905, %v1372, 0
        %v1434 = vsel %vm905, %v1373, 0
        %v1437 = vsel %vm905, %v1374, 0
        %v1440 = vsel %vm905, %v1375, 0
        %v1443 = vsel %vm905, %v1376, 0
        %v1446 = vsel %vm905, %v1377, 0
        %v1449 = vsel %vm905, %v1378, 0
        %v1452 = vsel %vm905, %v1379, 0
        %v1455 = vsel %vm905, %v1380, 0
        %v1458 = vsel %vm905, %v1381, 0
        %v1461 = vsel %vm905, %v1382, 0
        %v1464 = vsel %vm905, %v1383, 0
        %v1467 = vsel %vm905, %v1384, 0
        %v1470 = vsel %vm905, %v1385, 0
        %v1473 = vsel %vm905, %v1386, 0
        %v1476 = vsel %vm905, %v1387, 0
        %v1479 = vsel %vm905, %v1388, 0
        %v1482 = vsel %vm905, %v1389, 0
        %v1485 = vsel %vm905, %v1390, 0
        %v1488 = vsel %vm905, %v1391, 0
        %v1491 = vsel %vm905, %v1392, 0
        %v1494 = vsel %vm905, %v1393, 0
        %v1497 = vsel %vm905, %v1394, 0
        %1499 = vmatpush.msra.mxu0 0.0
        %1500 = vmatpush.msra.mxu0 0.0
        %1501 = vmatpush.msra.mxu0 0.0
        %1502 = vmatpush.msra.mxu0 0.0
        %1503 = vmatpush.msra.mxu0 0.0
        %1504 = vmatpush.msra.mxu0 0.0
        %1505 = vmatpush.msra.mxu0 0.0
        %1506 = vmatpush.msra.mxu0 0.0
        %1507 = vmatpush.msra.mxu0 0.0
        %1508 = vmatpush.msra.mxu0 0.0
        %1509 = vmatpush.msra.mxu0 0.0
        %1510 = vmatpush.msra.mxu0 0.0
        %1511 = vmatpush.msra.mxu0 %v1398
        %1512 = vmatpush.msra.mxu0 %v1397
        %1513 = vmatpush.msra.mxu0 %v1396
        %1514 = vmatpush.msra.mxu0 %v1395
        %1515 = vmatmul.f32.gmra.mxu0 %v1404
        %v1516 = vpop.f32.mrf.mxu0
        %v1517 = vadd.f32 %v1401, %v1516
        %1518 = vmatmul.f32.gmra.mxu0 %v1407
        %v1519 = vpop.f32.mrf.mxu0
        %v1520 = vadd.f32 %v1401, %v1519
        %1521 = vmatmul.f32.gmra.mxu0 %v1410
        %v1522 = vpop.f32.mrf.mxu0
        %v1523 = vadd.f32 %v1401, %v1522
        %1524 = vmatmul.f32.gmra.mxu0 %v1413
        %v1525 = vpop.f32.mrf.mxu0
        %v1526 = vadd.f32 %v1401, %v1525
        %1527 = vmatmul.f32.gmra.mxu0 %v1416
        %v1528 = vpop.f32.mrf.mxu0
        %v1529 = vadd.f32 %v1401, %v1528
        %1530 = vmatmul.f32.gmra.mxu0 %v1419
        %v1531 = vpop.f32.mrf.mxu0
        %v1532 = vadd.f32 %v1401, %v1531
        %1533 = vmatmul.f32.gmra.mxu0 %v1422
        %v1534 = vpop.f32.mrf.mxu0
        %v1535 = vadd.f32 %v1401, %v1534
        %1536 = vmatmul.f32.gmra.mxu0 %v1425
        %v1537 = vpop.f32.mrf.mxu0
        %v1538 = vadd.f32 %v1401, %v1537
        %1539 = vmatmul.f32.gmra.mxu0 %v1428
        %v1540 = vpop.f32.mrf.mxu0
        %v1541 = vadd.f32 %v1401, %v1540
        %1542 = vmatmul.f32.gmra.mxu0 %v1431
        %v1543 = vpop.f32.mrf.mxu0
        %v1544 = vadd.f32 %v1401, %v1543
        %1545 = vmatmul.f32.gmra.mxu0 %v1434
        %v1546 = vpop.f32.mrf.mxu0
        %v1547 = vadd.f32 %v1401, %v1546
        %1548 = vmatmul.f32.gmra.mxu0 %v1437
        %v1549 = vpop.f32.mrf.mxu0
        %v1550 = vadd.f32 %v1401, %v1549
        %1551 = vmatmul.f32.gmra.mxu0 %v1440
        %v1552 = vpop.f32.mrf.mxu0
        %v1553 = vadd.f32 %v1401, %v1552
        %1554 = vmatmul.f32.gmra.mxu0 %v1443
        %v1555 = vpop.f32.mrf.mxu0
        %v1556 = vadd.f32 %v1401, %v1555
        %1557 = vmatmul.f32.gmra.mxu0 %v1446
        %v1558 = vpop.f32.mrf.mxu0
        %v1559 = vadd.f32 %v1401, %v1558
        %1560 = vmatmul.f32.gmra.mxu0 %v1449
        %v1561 = vpop.f32.mrf.mxu0
        %v1562 = vadd.f32 %v1401, %v1561
        %1563 = vmatmul.f32.gmra.mxu0 %v1452
        %v1564 = vpop.f32.mrf.mxu0
        %v1565 = vadd.f32 %v1401, %v1564
        %1566 = vmatmul.f32.gmra.mxu0 %v1455
        %v1567 = vpop.f32.mrf.mxu0
        %v1568 = vadd.f32 %v1401, %v1567
        %1569 = vmatmul.f32.gmra.mxu0 %v1458
        %v1570 = vpop.f32.mrf.mxu0
        %v1571 = vadd.f32 %v1401, %v1570
        %1572 = vmatmul.f32.gmra.mxu0 %v1461
        %v1573 = vpop.f32.mrf.mxu0
        %v1574 = vadd.f32 %v1401, %v1573
        %1575 = vmatmul.f32.gmra.mxu0 %v1464
        %v1576 = vpop.f32.mrf.mxu0
        %v1577 = vadd.f32 %v1401, %v1576
        %1578 = vmatmul.f32.gmra.mxu0 %v1467
        %v1579 = vpop.f32.mrf.mxu0
        %v1580 = vadd.f32 %v1401, %v1579
        %1581 = vmatmul.f32.gmra.mxu0 %v1470
        %v1582 = vpop.f32.mrf.mxu0
        %v1583 = vadd.f32 %v1401, %v1582
        %1584 = vmatmul.f32.gmra.mxu0 %v1473
        %v1585 = vpop.f32.mrf.mxu0
        %v1586 = vadd.f32 %v1401, %v1585
        %1587 = vmatmul.f32.gmra.mxu0 %v1476
        %v1588 = vpop.f32.mrf.mxu0
        %v1589 = vadd.f32 %v1401, %v1588
        %1590 = vmatmul.f32.gmra.mxu0 %v1479
        %v1591 = vpop.f32.mrf.mxu0
        %v1592 = vadd.f32 %v1401, %v1591
        %1593 = vmatmul.f32.gmra.mxu0 %v1482
        %v1594 = vpop.f32.mrf.mxu0
        %v1595 = vadd.f32 %v1401, %v1594
        %1596 = vmatmul.f32.gmra.mxu0 %v1485
        %v1597 = vpop.f32.mrf.mxu0
        %v1598 = vadd.f32 %v1401, %v1597
        %1599 = vmatmul.f32.gmra.mxu0 %v1488
        %v1600 = vpop.f32.mrf.mxu0
        %v1601 = vadd.f32 %v1401, %v1600
        %1602 = vmatmul.f32.gmra.mxu0 %v1491
        %v1603 = vpop.f32.mrf.mxu0
        %v1604 = vadd.f32 %v1401, %v1603
        %1605 = vmatmul.f32.gmra.mxu0 %v1494
        %v1606 = vpop.f32.mrf.mxu0
        %v1607 = vadd.f32 %v1401, %v1606
        %1608 = vmatmul.f32.gmra.mxu0 %v1497
        %v1609 = vpop.f32.mrf.mxu0
        %v1610 = vadd.f32 %v1401, %v1609
        %1611 = vdwg.mxu0
        %v1612 = vmul.f32 %v1020, %v1517
        %v1613 = vmul.f32 %v1023, %v1520
        %v1614 = vmul.f32 %v1026, %v1523
        %v1615 = vmul.f32 %v1029, %v1526
        %v1616 = vmul.f32 %v1032, %v1529
        %v1617 = vmul.f32 %v1035, %v1532
        %v1618 = vmul.f32 %v1038, %v1535
        %v1619 = vmul.f32 %v1041, %v1538
        %v1620 = vmul.f32 %v1044, %v1541
        %v1621 = vmul.f32 %v1047, %v1544
        %v1622 = vmul.f32 %v1050, %v1547
        %v1623 = vmul.f32 %v1053, %v1550
        %v1624 = vmul.f32 %v1056, %v1553
        %v1625 = vmul.f32 %v1059, %v1556
        %v1626 = vmul.f32 %v1062, %v1559
        %v1627 = vmul.f32 %v1065, %v1562
        %v1628 = vmul.f32 %v1068, %v1565
        %v1629 = vmul.f32 %v1071, %v1568
        %v1630 = vmul.f32 %v1074, %v1571
        %v1631 = vmul.f32 %v1077, %v1574
        %v1632 = vmul.f32 %v1080, %v1577
        %v1633 = vmul.f32 %v1083, %v1580
        %v1634 = vmul.f32 %v1086, %v1583
        %v1635 = vmul.f32 %v1089, %v1586
        %v1636 = vmul.f32 %v1092, %v1589
        %v1637 = vmul.f32 %v1095, %v1592
        %v1638 = vmul.f32 %v1098, %v1595
        %v1639 = vmul.f32 %v1101, %v1598
        %v1640 = vmul.f32 %v1104, %v1601
        %v1641 = vmul.f32 %v1107, %v1604
        %v1642 = vmul.f32 %v1110, %v1607
        %v1643 = vmul.f32 %v1113, %v1610
        %v1644 = vld [vmem:[%s10] sm:$0xff]
        %v1645 = vld [vmem:[%s10 + $0x8] sm:$0xff]
        %v1646 = vld [vmem:[%s10 + $0x10] sm:$0xff]
        %v1647 = vld [vmem:[%s10 + $0x18] sm:$0xff]
        %v1648 = vld [vmem:[%s10 + $0x20] sm:$0xff]
        %v1649 = vld [vmem:[%s10 + $0x28] sm:$0xff]
        %v1650 = vld [vmem:[%s10 + $0x30] sm:$0xff]
        %v1651 = vld [vmem:[%s10 + $0x38] sm:$0xff]
        %v1652 = vld [vmem:[%s10 + $0x40] sm:$0xff]
        %v1653 = vld [vmem:[%s10 + $0x48] sm:$0xff]
        %v1654 = vld [vmem:[%s10 + $0x50] sm:$0xff]
        %v1655 = vld [vmem:[%s10 + $0x58] sm:$0xff]
        %vm1656 = vcmask 785408
        %v1658 = vsel %vm1656, %v1612, 0
        %v1661 = vsel %vm1656, %v1613, 0
        %v1664 = vsel %vm1656, %v1614, 0
        %v1667 = vsel %vm1656, %v1615, 0
        %v1670 = vsel %vm1656, %v1616, 0
        %v1673 = vsel %vm1656, %v1617, 0
        %v1676 = vsel %vm1656, %v1618, 0
        %v1679 = vsel %vm1656, %v1619, 0
        %v1682 = vsel %vm1656, %v1620, 0
        %v1685 = vsel %vm1656, %v1621, 0
        %v1688 = vsel %vm1656, %v1622, 0
        %v1691 = vsel %vm1656, %v1623, 0
        %v1694 = vsel %vm1656, %v1624, 0
        %v1697 = vsel %vm1656, %v1625, 0
        %v1700 = vsel %vm1656, %v1626, 0
        %v1703 = vsel %vm1656, %v1627, 0
        %v1706 = vsel %vm1656, %v1628, 0
        %v1709 = vsel %vm1656, %v1629, 0
        %v1712 = vsel %vm1656, %v1630, 0
        %v1715 = vsel %vm1656, %v1631, 0
        %v1718 = vsel %vm1656, %v1632, 0
        %v1721 = vsel %vm1656, %v1633, 0
        %v1724 = vsel %vm1656, %v1634, 0
        %v1727 = vsel %vm1656, %v1635, 0
        %v1730 = vsel %vm1656, %v1636, 0
        %v1733 = vsel %vm1656, %v1637, 0
        %v1736 = vsel %vm1656, %v1638, 0
        %v1739 = vsel %vm1656, %v1639, 0
        %v1742 = vsel %vm1656, %v1640, 0
        %v1745 = vsel %vm1656, %v1641, 0
        %v1748 = vsel %vm1656, %v1642, 0
        %v1751 = vsel %vm1656, %v1643, 0
        %1753 = vmatpush.msra.mxu0 0.0
        %1754 = vmatpush.msra.mxu0 0.0
        %1755 = vmatpush.msra.mxu0 0.0
        %1756 = vmatpush.msra.mxu0 0.0
        %1757 = vmatpush.msra.mxu0 %v1655
        %1758 = vmatpush.msra.mxu0 %v1654
        %1759 = vmatpush.msra.mxu0 %v1653
        %1760 = vmatpush.msra.mxu0 %v1652
        %1761 = vmatpush.msra.mxu0 %v1651
        %1762 = vmatpush.msra.mxu0 %v1650
        %1763 = vmatpush.msra.mxu0 %v1649
        %1764 = vmatpush.msra.mxu0 %v1648
        %1765 = vmatpush.msra.mxu0 %v1647
        %1766 = vmatpush.msra.mxu0 %v1646
        %1767 = vmatpush.msra.mxu0 %v1645
        %1768 = vmatpush.msra.mxu0 %v1644
        %1769 = vmatmul.f32.gmra.mxu0 %v1658
        %v1770 = vpop.f32.mrf.mxu0
        %v1771 = vadd.f32 0.0, %v1770
        %1772 = vmatmul.f32.gmra.mxu0 %v1661
        %v1773 = vpop.f32.mrf.mxu0
        %v1774 = vadd.f32 0.0, %v1773
        %1775 = vmatmul.f32.gmra.mxu0 %v1664
        %v1776 = vpop.f32.mrf.mxu0
        %v1777 = vadd.f32 0.0, %v1776
        %1778 = vmatmul.f32.gmra.mxu0 %v1667
        %v1779 = vpop.f32.mrf.mxu0
        %v1780 = vadd.f32 0.0, %v1779
        %1781 = vmatmul.f32.gmra.mxu0 %v1670
        %v1782 = vpop.f32.mrf.mxu0
        %v1783 = vadd.f32 0.0, %v1782
        %1784 = vmatmul.f32.gmra.mxu0 %v1673
        %v1785 = vpop.f32.mrf.mxu0
        %v1786 = vadd.f32 0.0, %v1785
        %1787 = vmatmul.f32.gmra.mxu0 %v1676
        %v1788 = vpop.f32.mrf.mxu0
        %v1789 = vadd.f32 0.0, %v1788
        %1790 = vmatmul.f32.gmra.mxu0 %v1679
        %v1791 = vpop.f32.mrf.mxu0
        %v1792 = vadd.f32 0.0, %v1791
        %1793 = vmatmul.f32.gmra.mxu0 %v1682
        %v1794 = vpop.f32.mrf.mxu0
        %v1795 = vadd.f32 0.0, %v1794
        %1796 = vmatmul.f32.gmra.mxu0 %v1685
        %v1797 = vpop.f32.mrf.mxu0
        %v1798 = vadd.f32 0.0, %v1797
        %1799 = vmatmul.f32.gmra.mxu0 %v1688
        %v1800 = vpop.f32.mrf.mxu0
        %v1801 = vadd.f32 0.0, %v1800
        %1802 = vmatmul.f32.gmra.mxu0 %v1691
        %v1803 = vpop.f32.mrf.mxu0
        %v1804 = vadd.f32 0.0, %v1803
        %1805 = vmatmul.f32.gmra.mxu0 %v1694
        %v1806 = vpop.f32.mrf.mxu0
        %v1807 = vadd.f32 0.0, %v1806
        %1808 = vmatmul.f32.gmra.mxu0 %v1697
        %v1809 = vpop.f32.mrf.mxu0
        %v1810 = vadd.f32 0.0, %v1809
        %1811 = vmatmul.f32.gmra.mxu0 %v1700
        %v1812 = vpop.f32.mrf.mxu0
        %v1813 = vadd.f32 0.0, %v1812
        %1814 = vmatmul.f32.gmra.mxu0 %v1703
        %v1815 = vpop.f32.mrf.mxu0
        %v1816 = vadd.f32 0.0, %v1815
        %1817 = vmatmul.f32.gmra.mxu0 %v1706
        %v1818 = vpop.f32.mrf.mxu0
        %v1819 = vadd.f32 0.0, %v1818
        %1820 = vmatmul.f32.gmra.mxu0 %v1709
        %v1821 = vpop.f32.mrf.mxu0
        %v1822 = vadd.f32 0.0, %v1821
        %1823 = vmatmul.f32.gmra.mxu0 %v1712
        %v1824 = vpop.f32.mrf.mxu0
        %v1825 = vadd.f32 0.0, %v1824
        %1826 = vmatmul.f32.gmra.mxu0 %v1715
        %v1827 = vpop.f32.mrf.mxu0
        %v1828 = vadd.f32 0.0, %v1827
        %1829 = vmatmul.f32.gmra.mxu0 %v1718
        %v1830 = vpop.f32.mrf.mxu0
        %v1831 = vadd.f32 0.0, %v1830
        %1832 = vmatmul.f32.gmra.mxu0 %v1721
        %v1833 = vpop.f32.mrf.mxu0
        %v1834 = vadd.f32 0.0, %v1833
        %1835 = vmatmul.f32.gmra.mxu0 %v1724
        %v1836 = vpop.f32.mrf.mxu0
        %v1837 = vadd.f32 0.0, %v1836
        %1838 = vmatmul.f32.gmra.mxu0 %v1727
        %v1839 = vpop.f32.mrf.mxu0
        %v1840 = vadd.f32 0.0, %v1839
        %1841 = vmatmul.f32.gmra.mxu0 %v1730
        %v1842 = vpop.f32.mrf.mxu0
        %v1843 = vadd.f32 0.0, %v1842
        %1844 = vmatmul.f32.gmra.mxu0 %v1733
        %v1845 = vpop.f32.mrf.mxu0
        %v1846 = vadd.f32 0.0, %v1845
        %1847 = vmatmul.f32.gmra.mxu0 %v1736
        %v1848 = vpop.f32.mrf.mxu0
        %v1849 = vadd.f32 0.0, %v1848
        %1850 = vmatmul.f32.gmra.mxu0 %v1739
        %v1851 = vpop.f32.mrf.mxu0
        %v1852 = vadd.f32 0.0, %v1851
        %1853 = vmatmul.f32.gmra.mxu0 %v1742
        %v1854 = vpop.f32.mrf.mxu0
        %v1855 = vadd.f32 0.0, %v1854
        %1856 = vmatmul.f32.gmra.mxu0 %v1745
        %v1857 = vpop.f32.mrf.mxu0
        %v1858 = vadd.f32 0.0, %v1857
        %1859 = vmatmul.f32.gmra.mxu0 %v1748
        %v1860 = vpop.f32.mrf.mxu0
        %v1861 = vadd.f32 0.0, %v1860
        %1862 = vmatmul.f32.gmra.mxu0 %v1751
        %v1863 = vpop.f32.mrf.mxu0
        %v1864 = vadd.f32 0.0, %v1863
        %1865 = vdwg.mxu0
        %1866 = vst [vmem:[%s396] sm:$0xff] %v1771
        %1867 = vst [vmem:[%s396 + $0x8] sm:$0xff] %v1774
        %1868 = vst [vmem:[%s396 + $0x10] sm:$0xff] %v1777
        %1869 = vst [vmem:[%s396 + $0x18] sm:$0xff] %v1780
        %1870 = vst [vmem:[%s396 + $0x20] sm:$0xff] %v1783
        %1871 = vst [vmem:[%s396 + $0x28] sm:$0xff] %v1786
        %1872 = vst [vmem:[%s396 + $0x30] sm:$0xff] %v1789
        %1873 = vst [vmem:[%s396 + $0x38] sm:$0xff] %v1792
        %1874 = vst [vmem:[%s396 + $0x40] sm:$0xff] %v1795
        %1875 = vst [vmem:[%s396 + $0x48] sm:$0xff] %v1798
        %1876 = vst [vmem:[%s396 + $0x50] sm:$0xff] %v1801
        %1877 = vst [vmem:[%s396 + $0x58] sm:$0xff] %v1804
        %1878 = vst [vmem:[%s396 + $0x60] sm:$0xff] %v1807
        %1879 = vst [vmem:[%s396 + $0x68] sm:$0xff] %v1810
        %1880 = vst [vmem:[%s396 + $0x70] sm:$0xff] %v1813
        %1881 = vst [vmem:[%s396 + $0x78] sm:$0xff] %v1816
        %1882 = vst [vmem:[%s396 + $0x80] sm:$0xff] %v1819
        %1883 = vst [vmem:[%s396 + $0x88] sm:$0xff] %v1822
        %1884 = vst [vmem:[%s396 + $0x90] sm:$0xff] %v1825
        %1885 = vst [vmem:[%s396 + $0x98] sm:$0xff] %v1828
        %1886 = vst [vmem:[%s396 + $0xa0] sm:$0xff] %v1831
        %1887 = vst [vmem:[%s396 + $0xa8] sm:$0xff] %v1834
        %1888 = vst [vmem:[%s396 + $0xb0] sm:$0xff] %v1837
        %1889 = vst [vmem:[%s396 + $0xb8] sm:$0xff] %v1840
        %1890 = vst [vmem:[%s396 + $0xc0] sm:$0xff] %v1843
        %1891 = vst [vmem:[%s396 + $0xc8] sm:$0xff] %v1846
        %1892 = vst [vmem:[%s396 + $0xd0] sm:$0xff] %v1849
        %1893 = vst [vmem:[%s396 + $0xd8] sm:$0xff] %v1852
        %1894 = vst [vmem:[%s396 + $0xe0] sm:$0xff] %v1855
        %1895 = vst [vmem:[%s396 + $0xe8] sm:$0xff] %v1858
        %1896 = vst [vmem:[%s396 + $0xf0] sm:$0xff] %v1861
        %1897 = vst [vmem:[%s396 + $0xf8] sm:$0xff] %v1864
        %s1898 = sand.u32 %s274, 1
        %s1899 = scalar_lea.sflag [#allocation3], %s1898
        %s1900 = sand.u32 %s274, 1
        %s1901 = smul.addr %s1900, 256
        %s1902 = scalar_lea.vmem [#allocation2], %s1901
        // Predicated region
        $region65: #{tpu_custom_call.1} parent=63 // pred_check
          %p1903 = pneg %p284
        $region66: #{tpu_custom_call.1} parent=63 // pred_check_branch
          %1905 = sbr.rel (%p1903) target = $region68
        $region67: #{tpu_custom_call.1} parent=63 // pred_region
          %s1906 = smul.u32 32, %s25
          %1908 = vsyncadd %s1899, 0
          %s1909 = smul.addr %s1906, 8
          %s1910 = scalar_lea.hbm %s11, %s1909
          %s1911 = sshll.u32 %s1902, 4
          %s1912 = int_to_ptr.vmem [resolvable:$true] %s1911
          %s1913 = sshll.u32 %s1910, 4
          %s1914 = int_to_ptr.hbm [resolvable:$true] %s1913
          %1919 = dma.vmem_to_hbm [thread:$0]  %s1912, 4096, %s1914, %s1899, 128, 128, 8
        $region68: #{tpu_custom_call.1} parent=63 // pred_fallthru
          _
      $region64: #{tpu_custom_call.1} parent=5 // pred_fallthru
        _
      %p1920 = scmp.le.s32.totalorder 2, %s20
      // Predicated region
      $region69: #{tpu_custom_call.1} parent=5 // pred_check
        %p1921 = pneg %p1920
      $region70: #{tpu_custom_call.1} parent=5 // pred_check_branch
        %1923 = sbr.rel (%p1921) target = $region72
      $region71: #{tpu_custom_call.1} parent=5 // pred_region
        %s1924 = ssub.s32 %s20, 2
        // Predicated region
        $region73: #{tpu_custom_call.1} parent=71 // pred_check
          %p1925 = pneg %p290
        $region74: #{tpu_custom_call.1} parent=71 // pred_check_branch
          %1927 = sbr.rel (%p1925) target = $region76
        $region75: #{tpu_custom_call.1} parent=71 // pred_region
          %s1928 = sand.u32 %s275, 1
          %s1929 = scalar_lea.sflag [#allocation3], %s1928
          %s1930 = sand.u32 %s275, 1
          %s1931 = smul.addr %s1930, 256
          %s1932 = scalar_lea.vmem [#allocation2], %s1931
          %1934 = dma.done %s1929, 4096
        $region76: #{tpu_custom_call.1} parent=71 // pred_fallthru
          _
      $region72: #{tpu_custom_call.1} parent=5 // pred_fallthru
        _
    $region6: #{tpu_custom_call.1} parent=1 // loop_footer
      %s24 = sadd.s32 1, %s20
    $region7: #{tpu_custom_call.1} parent=1 // loop_footer_branch
      %19 = sbr.rel target = $region3
    $region8: #{tpu_custom_call.1} parent=1 // loop_exit
      _
    %1935 = vsyncpa [#allocation3], 1
    %s1936 = scalar_lea.sflag [#allocation3], 1
    %1937 = vsyncpa %s1936, 1

</llo_original>
